<compile_context>
chip_gen: v7x
topology: tpu7x:2x2x1
jax: 0.10.0
libtpu: 0.0.40
codegen_flags: <defaults>
</compile_context>

<pallas_src>
import jax
import jax.numpy as jnp
from jax import lax
from jax.experimental import pallas as pl
from jax.experimental.pallas import tpu as pltpu


# --------------------------------------------------------------------------
# Fused kernel: regenerate MLP_tiny frequency weights per tile + complex mul
# --------------------------------------------------------------------------
def _freq_conv_fused_kernel(m_ref, w1r_ref, b1r_ref, w2r_ref, b2r_ref,
                            w1i_ref, b1i_ref, w2i_ref, b2i_ref,
                            xr_ref, xi_ref, or_ref, oi_ref):
    # m_ref : (2, tp)                       mask tile (frequency-coordinate features)
    # w1*   : (8, 2)   b1*: (8, 1)          MLP_tiny layer 1 (Conv2d(2,8,1))
    # w2*   : (Cin, tc, 8)  b2*: (Cin, tc, 1)  MLP_tiny layer 2 (Conv2d(8,planes,1)),
    #                                          reshaped so w2[i] is this Cout-tile's slice
    # xr/xi : (Cin, tp)                     real/imag fft(x) tile for one batch element
    # or/oi : (tc, tp)                      real/imag output tile
    cin = xr_ref.shape[0]
    tc, tp = or_ref.shape

    m0 = m_ref[0:1, :]                                    # (1, tp)
    m1 = m_ref[1:2, :]                                    # (1, tp)

    def hidden(w1_ref, b1_ref):
        w1 = w1_ref[...]                                  # (8, 2)
        # K=2 first 1x1 conv: two VPU broadcast-FMAs per hidden channel (an MXU
        # contraction with K=2 would be <3% utilized).
        h = w1[:, 0:1] * m0 + w1[:, 1:2] * m1 + b1_ref[...]   # (8, tp)
        return h * jax.nn.sigmoid(h)                           # SiLU (EUP)

    h_r = hidden(w1r_ref, b1r_ref)                        # (8, tp)
    h_i = hidden(w1i_ref, b1i_ref)                        # (8, tp)

    def step(i, acc_r, acc_i):
        # Regenerate the i-th Cin slice of the frequency weights on the fly
        # (K=8 second 1x1 conv, MXU) — the generated weights never touch HBM.
        wr_i = (jnp.dot(w2r_ref[i], h_r, preferred_element_type=jnp.float32)
                + b2r_ref[i])                             # (tc, tp)
        wi_i = (jnp.dot(w2i_ref[i], h_i, preferred_element_type=jnp.float32)
                + b2i_ref[i])                             # (tc, tp)
        # One slice + ONE explicit sublane broadcast per operand per i, reused
        # for both accumulates (broadcast_in_dim is not CSE'd by JAX).
        xr_b = jnp.broadcast_to(xr_ref[pl.ds(i, 1), :], (tc, tp))
        xi_b = jnp.broadcast_to(xi_ref[pl.ds(i, 1), :], (tc, tp))
        acc_r = acc_r + xr_b * wr_i - xi_b * wi_i
        acc_i = acc_i + xr_b * wi_i + xi_b * wr_i
        return acc_r, acc_i

    acc_r = jnp.zeros((tc, tp), jnp.float32)              # vreg-resident (tc*tp <= ~16K)
    acc_i = jnp.zeros((tc, tp), jnp.float32)
    if cin <= 16:
        for i in range(cin):                              # static unroll for small Cin
            acc_r, acc_i = step(i, acc_r, acc_i)
    else:
        # Large Cin: bound code size / live ranges with a rolled loop.
        acc_r, acc_i = lax.fori_loop(
            0, cin, lambda i, c: step(i, *c), (acc_r, acc_i), unroll=4)

    or_ref[...] = acc_r
    oi_ref[...] = acc_i


def _pick_tiles(P, Cout):
    """Pick a lane-dense H*W tile tp and a Cout tile tc.

    tp: largest multiple-of-128 divisor of P (capped) -> lane-dense unmasked stores.
    tc: divisor of Cout (multiple of 8, or Cout itself) such that the two (tc, tp)
        f32 accumulators stay <= ~16K elems each, i.e. vreg-resident (no spills).
    """
    ACC_BUDGET = 16 * 1024                                # f32 elems per accumulator
    lane_tiles = [t for t in (2048, 1024, 512, 256, 128) if P % t == 0] or [P]
    co_tiles = sorted({Cout} | {t for t in range(8, Cout + 1, 8) if Cout % t == 0},
                      reverse=True)
    for tp in lane_tiles:
        for tc in co_tiles:
            if tc * tp <= ACC_BUDGET:
                return tp, tc
    # Graceful degradation: smallest valid tiles (may spill accumulators a bit,
    # but never violates layout rules or the scoped-VMEM limit).
    return lane_tiles[-1], co_tiles[-1]


def fused_freq_conv(mask_flat, w1r, b1r, w2r, b2r, w1i, b1i, w2i, b2i, xr, xi):
    B, Cin, P = xr.shape
    Cout = w2r.shape[1]
    tp, tc = _pick_tiles(P, Cout)
    # All three axes produce independent output blocks -> all "parallel"
    # (v7x gets work on both TensorCores even when B == 1).  Cout-tiles are
    # innermost so the (larger) x/mask blocks are reused across that axis.
    grid = (B, P // tp, Cout // tc)

    mask_spec = pl.BlockSpec((2, tp), lambda b, p, c: (0, p))
    w1_spec = pl.BlockSpec((8, 2), lambda b, p, c: (0, 0))
    b1_spec = pl.BlockSpec((8, 1), lambda b, p, c: (0, 0))
    w2_spec = pl.BlockSpec((Cin, tc, 8), lambda b, p, c: (0, c, 0))
    b2_spec = pl.BlockSpec((Cin, tc, 1), lambda b, p, c: (0, c, 0))
    x_spec = pl.BlockSpec((pl.Squeezed(), Cin, tp), lambda b, p, c: (b, 0, p))
    o_spec = pl.BlockSpec((pl.Squeezed(), tc, tp), lambda b, p, c: (b, c, p))

    n_steps = B * (P // tp) * (Cout // tc)
    # complex FMA (8) + on-the-fly K=8 weight matmuls (32) per (b, i, o, pixel),
    # plus the cheap hidden layer per grid step.
    flops = 40 * B * Cin * Cout * P + 112 * n_steps * tp
    transcendentals = 16 * n_steps * tp
    bytes_accessed = 4 * (2 * B * Cin * P            # fft(x) real+imag in
                          + 2 * B * Cout * P         # out real+imag
                          + 2 * n_steps * tp         # mask re-reads
                          + 2 * (16 + 8 + Cin * Cout * 8 + Cin * Cout))

    return pl.pallas_call(
        _freq_conv_fused_kernel,
        out_shape=(jax.ShapeDtypeStruct((B, Cout, P), jnp.float32),
                   jax.ShapeDtypeStruct((B, Cout, P), jnp.float32)),
        grid=grid,
        in_specs=[mask_spec, w1_spec, b1_spec, w2_spec, b2_spec,
                  w1_spec, b1_spec, w2_spec, b2_spec, x_spec, x_spec],
        out_specs=(o_spec, o_spec),
        compiler_params=pltpu.CompilerParams(
            dimension_semantics=("parallel", "parallel", "parallel"),
            vmem_limit_bytes=32 * 1024 * 1024,        # tiles are small; v7x-safe
        ),
        cost_estimate=pl.CostEstimate(
            flops=flops, transcendentals=transcendentals,
            bytes_accessed=bytes_accessed),
    )(mask_flat, w1r, b1r, w2r, b2r, w1i, b1i, w2i, b2i, xr, xi)


# --------------------------------------------------------------------------
# Full forward: FreqConv_full_fft
# --------------------------------------------------------------------------
def _build_mask(H, W):
    # Exactly mirrors the torch mask construction: shape (2, W, H).
    r0 = jnp.arange(-(H / 2), H / 2, dtype=jnp.float32)              # (H,)
    m0 = jnp.broadcast_to(r0[None, :], (W, H))                       # (W, H)
    r1 = jnp.arange(-(W / 2), W / 2, dtype=jnp.float32)              # (W,)
    m1 = jnp.broadcast_to(r1[:, None], (W, H))                       # (W, H)
    return jnp.stack([m0, m1], axis=0)                               # (2, W, H)


def freq_conv_full_fft(x, params, in_planes, out_planes):
    B, Cin, H, W = x.shape
    assert Cin == in_planes
    P = H * W

    # The MLP runs on the flattened (W, H) mask; torch's contiguous reshape of the
    # generated (planes, W, H) weights to (Cin, Cout, H, W) makes the flat spatial
    # index line up with x's (H, W) flattening, so a plain flatten matches exactly.
    mask_flat = _build_mask(H, W).reshape(2, P)                      # (2, P)

    # TODO(synk): FFT has no Pallas/Mosaic equivalent; fft2 + fftshift stay in
    # plain JAX/XLA.  fftshift is over ALL dims (torch dim=None), which also rolls
    # the batch/channel axes — matching the original module exactly.
    xf = jnp.fft.fftshift(jnp.fft.fft2(x))
    xr = jnp.real(xf).astype(jnp.float32).reshape(B, Cin, P)
    xi = jnp.imag(xf).astype(jnp.float32).reshape(B, Cin, P)

    def prep(p):
        # Conv2d(2,8,1) and Conv2d(8,planes,1) params; layer-2 reshaped so the
        # kernel can index the Cout slice belonging to input channel i directly
        # (planes index = i*Cout + o, matching the torch contiguous view).
        return (p["w1"], p["b1"].reshape(8, 1),
                p["w2"].reshape(in_planes, out_planes, 8),
                p["b2"].reshape(in_planes, out_planes, 1))

    or_, oi = fused_freq_conv(mask_flat,
                              *prep(params["real"]), *prep(params["imag"]),
                              xr, xi)                                 # (B, Cout, P) each
    return lax.complex(or_, oi).reshape(B, out_planes, H, W)         # complex64


# --------------------------------------------------------------------------
# Pure-JAX reference (mirrors the torch module exactly, for a sanity check)
# --------------------------------------------------------------------------
def ref_forward(x, params, in_planes, out_planes):
    B, Cin, H, W = x.shape
    mask = _build_mask(H, W)                                          # (2, W, H)

    def mlp(p):
        h = jnp.einsum("oc,cwh->owh", p["w1"], mask) + p["b1"][:, None, None]
        h = h * jax.nn.sigmoid(h)
        o = jnp.einsum("oc,cwh->owh", p["w2"], h) + p["b2"][:, None, None]
        return o.reshape(in_planes, out_planes, H, W)

    weights = mlp(params["real"]) + 1j * mlp(params["imag"])
    xf = jnp.fft.fftshift(jnp.fft.fft2(x))
    return jnp.einsum("bihw,iohw->bohw", xf, weights)


# --------------------------------------------------------------------------
if __name__ == "__main__":
    B, Cin, Cout, H, W = 2, 4, 4, 16, 16
    planes = Cin * Cout

    key = jax.random.PRNGKey(0)
    kx, kp = jax.random.split(key)
    x = jax.random.normal(kx, (B, Cin, H, W), dtype=jnp.float32)

    def init_mlp(k):
        k1, k2, k3, k4 = jax.random.split(k, 4)
        # Conv2d(2,8,1): weight (8,2,1,1) -> (8,2); bias (8,)
        # Conv2d(8,planes,1): weight (planes,8,1,1) -> (planes,8); bias (planes,)
        return {
            "w1": 0.1 * jax.random.normal(k1, (8, 2), jnp.float32),
            "b1": 0.1 * jax.random.normal(k2, (8,), jnp.float32),
            "w2": 0.1 * jax.random.normal(k3, (planes, 8), jnp.float32),
            "b2": 0.1 * jax.random.normal(k4, (planes,), jnp.float32),
        }

    kr, ki = jax.random.split(kp)
    params = {"real": init_mlp(kr), "imag": init_mlp(ki)}

    out = freq_conv_full_fft(x, params, Cin, Cout)
    out = jax.block_until_ready(out)

    ref = jax.block_until_ready(ref_forward(x, params, Cin, Cout))
    assert out.shape == (B, Cout, H, W) and out.dtype == jnp.complex64
    err = jnp.max(jnp.abs(out - ref))
    scale = 1.0 + jnp.max(jnp.abs(ref))
    assert err / scale < 1e-3, f"mismatch: {err}"

    print("KERNEL_OK")
</pallas_src>

<mosaic_0001>
module attributes {stable_mosaic.version = 11 : i64} {
  func.func @_freq_conv_fused_kernel(%arg0: i32, %arg1: i32, %arg2: i32, %arg3: memref<2x256xf32, #tpu.memory_space<vmem>>, %arg4: memref<8x2xf32, #tpu.memory_space<vmem>>, %arg5: memref<8x1xf32, #tpu.memory_space<vmem>>, %arg6: memref<4x4x8xf32, #tpu.memory_space<vmem>>, %arg7: memref<4x4x1xf32, #tpu.memory_space<vmem>>, %arg8: memref<8x2xf32, #tpu.memory_space<vmem>>, %arg9: memref<8x1xf32, #tpu.memory_space<vmem>>, %arg10: memref<4x4x8xf32, #tpu.memory_space<vmem>>, %arg11: memref<4x4x1xf32, #tpu.memory_space<vmem>>, %arg12: memref<1x4x256xf32, #tpu.memory_space<vmem>>, %arg13: memref<1x4x256xf32, #tpu.memory_space<vmem>>, %arg14: memref<1x4x256xf32, #tpu.memory_space<vmem>>, %arg15: memref<1x4x256xf32, #tpu.memory_space<vmem>>) attributes {dimension_semantics = [#tpu.dimension_semantics<parallel>, #tpu.dimension_semantics<parallel>, #tpu.dimension_semantics<parallel>], iteration_bounds = array<i64: 2, 1, 1>, scalar_prefetch = 0 : i64, scratch_operands = 0 : i64, tpu.core_type = #tpu.core_type<tc>, window_params = [{transform_indices = @transform_0, window_bounds = array<i64: 2, 256>}, {pipeline_mode = #tpu.pipeline_mode<synchronous>, transform_indices = @transform_1, window_bounds = array<i64: 8, 2>}, {pipeline_mode = #tpu.pipeline_mode<synchronous>, transform_indices = @transform_2, window_bounds = array<i64: 8, 1>}, {transform_indices = @transform_3, window_bounds = array<i64: 4, 4, 8>}, {transform_indices = @transform_4, window_bounds = array<i64: 4, 4, 1>}, {pipeline_mode = #tpu.pipeline_mode<synchronous>, transform_indices = @transform_5, window_bounds = array<i64: 8, 2>}, {pipeline_mode = #tpu.pipeline_mode<synchronous>, transform_indices = @transform_6, window_bounds = array<i64: 8, 1>}, {transform_indices = @transform_7, window_bounds = array<i64: 4, 4, 8>}, {transform_indices = @transform_8, window_bounds = array<i64: 4, 4, 1>}, {transform_indices = @transform_9, window_bounds = array<i64: 1, 4, 256>}, {transform_indices = @transform_10, window_bounds = array<i64: 1, 4, 256>}, {transform_indices = @transform_11, window_bounds = array<i64: 1, 4, 256>}, {transform_indices = @transform_12, window_bounds = array<i64: 1, 4, 256>}]} {
    %c0 = arith.constant 0 : index
    %c0_0 = arith.constant 0 : index
    %0 = vector.load %arg3[%c0, %c0_0] : memref<2x256xf32, #tpu.memory_space<vmem>>, vector<1x256xf32>
    %c1 = arith.constant 1 : index
    %c0_1 = arith.constant 0 : index
    %1 = vector.load %arg3[%c1, %c0_1] : memref<2x256xf32, #tpu.memory_space<vmem>>, vector<1x256xf32>
    %c0_2 = arith.constant 0 : index
    %c0_3 = arith.constant 0 : index
    %2 = vector.load %arg4[%c0_2, %c0_3] : memref<8x2xf32, #tpu.memory_space<vmem>>, vector<8x2xf32>
    %3 = vector.extract_strided_slice %2 {offsets = [0, 0], sizes = [8, 1], strides = [1, 1]} : vector<8x2xf32> to vector<8x1xf32>
    %4 = vector.broadcast %3 : vector<8x1xf32> to vector<8x256xf32>
    %5 = vector.broadcast %0 : vector<1x256xf32> to vector<8x256xf32>
    %6 = arith.mulf %4, %5 : vector<8x256xf32>
    %7 = vector.extract_strided_slice %2 {offsets = [0, 1], sizes = [8, 1], strides = [1, 1]} : vector<8x2xf32> to vector<8x1xf32>
    %8 = vector.broadcast %7 : vector<8x1xf32> to vector<8x256xf32>
    %9 = vector.broadcast %1 : vector<1x256xf32> to vector<8x256xf32>
    %10 = arith.mulf %8, %9 : vector<8x256xf32>
    %11 = arith.addf %6, %10 : vector<8x256xf32>
    %c0_4 = arith.constant 0 : index
    %c0_5 = arith.constant 0 : index
    %12 = vector.load %arg5[%c0_4, %c0_5] : memref<8x1xf32, #tpu.memory_space<vmem>>, vector<8x1xf32>
    %13 = vector.broadcast %12 : vector<8x1xf32> to vector<8x256xf32>
    %14 = arith.addf %11, %13 : vector<8x256xf32>
    %15 = arith.negf %14 : vector<8x256xf32>
    %16 = math.exp %15 : vector<8x256xf32>
    %cst = arith.constant 1.000000e+00 : f32
    %17 = vector.broadcast %cst : f32 to vector<8x256xf32>
    %18 = arith.addf %17, %16 : vector<8x256xf32>
    %19 = arith.divf %17, %18 : vector<8x256xf32>
    %20 = arith.mulf %14, %19 : vector<8x256xf32>
    %c0_6 = arith.constant 0 : index
    %c0_7 = arith.constant 0 : index
    %21 = vector.load %arg8[%c0_6, %c0_7] : memref<8x2xf32, #tpu.memory_space<vmem>>, vector<8x2xf32>
    %22 = vector.extract_strided_slice %21 {offsets = [0, 0], sizes = [8, 1], strides = [1, 1]} : vector<8x2xf32> to vector<8x1xf32>
    %23 = vector.broadcast %22 : vector<8x1xf32> to vector<8x256xf32>
    %24 = vector.broadcast %0 : vector<1x256xf32> to vector<8x256xf32>
    %25 = arith.mulf %23, %24 : vector<8x256xf32>
    %26 = vector.extract_strided_slice %21 {offsets = [0, 1], sizes = [8, 1], strides = [1, 1]} : vector<8x2xf32> to vector<8x1xf32>
    %27 = vector.broadcast %26 : vector<8x1xf32> to vector<8x256xf32>
    %28 = vector.broadcast %1 : vector<1x256xf32> to vector<8x256xf32>
    %29 = arith.mulf %27, %28 : vector<8x256xf32>
    %30 = arith.addf %25, %29 : vector<8x256xf32>
    %c0_8 = arith.constant 0 : index
    %c0_9 = arith.constant 0 : index
    %31 = vector.load %arg9[%c0_8, %c0_9] : memref<8x1xf32, #tpu.memory_space<vmem>>, vector<8x1xf32>
    %32 = vector.broadcast %31 : vector<8x1xf32> to vector<8x256xf32>
    %33 = arith.addf %30, %32 : vector<8x256xf32>
    %34 = arith.negf %33 : vector<8x256xf32>
    %35 = math.exp %34 : vector<8x256xf32>
    %cst_10 = arith.constant 1.000000e+00 : f32
    %36 = vector.broadcast %cst_10 : f32 to vector<8x256xf32>
    %37 = arith.addf %36, %35 : vector<8x256xf32>
    %38 = arith.divf %36, %37 : vector<8x256xf32>
    %39 = arith.mulf %33, %38 : vector<8x256xf32>
    %cst_11 = arith.constant 0.000000e+00 : f32
    %40 = vector.broadcast %cst_11 : f32 to vector<4x256xf32>
    %cst_12 = arith.constant 0.000000e+00 : f32
    %41 = vector.broadcast %cst_12 : f32 to vector<4x256xf32>
    %c0_13 = arith.constant 0 : index
    %c0_14 = arith.constant 0 : index
    %c0_15 = arith.constant 0 : index
    %42 = vector.load %arg6[%c0_13, %c0_14, %c0_15] : memref<4x4x8xf32, #tpu.memory_space<vmem>>, vector<1x4x8xf32>
    %43 = vector.shape_cast %42 : vector<1x4x8xf32> to vector<4x8xf32>
    %cst_16 = arith.constant dense<0.000000e+00> : vector<4x256xf32>
    %44 = tpu.matmul %43, %20, %cst_16 {dimension_numbers = #tpu.dot_dimension_numbers<[1], [0], [0], [1], [0, 0, 1, 1], [], []>} : vector<4x8xf32>, vector<8x256xf32>, vector<4x256xf32> -> vector<4x256xf32>
    %c0_17 = arith.constant 0 : index
    %c0_18 = arith.constant 0 : index
    %c0_19 = arith.constant 0 : index
    %45 = vector.load %arg7[%c0_17, %c0_18, %c0_19] : memref<4x4x1xf32, #tpu.memory_space<vmem>>, vector<1x4x1xf32>
    %46 = vector.shape_cast %45 : vector<1x4x1xf32> to vector<4x1xf32>
    %47 = vector.broadcast %46 : vector<4x1xf32> to vector<4x256xf32>
    %48 = arith.addf %44, %47 : vector<4x256xf32>
    %c0_20 = arith.constant 0 : index
    %c0_21 = arith.constant 0 : index
    %c0_22 = arith.constant 0 : index
    %49 = vector.load %arg10[%c0_20, %c0_21, %c0_22] : memref<4x4x8xf32, #tpu.memory_space<vmem>>, vector<1x4x8xf32>
    %50 = vector.shape_cast %49 : vector<1x4x8xf32> to vector<4x8xf32>
    %cst_23 = arith.constant dense<0.000000e+00> : vector<4x256xf32>
    %51 = tpu.matmul %50, %39, %cst_23 {dimension_numbers = #tpu.dot_dimension_numbers<[1], [0], [0], [1], [0, 0, 1, 1], [], []>} : vector<4x8xf32>, vector<8x256xf32>, vector<4x256xf32> -> vector<4x256xf32>
    %c0_24 = arith.constant 0 : index
    %c0_25 = arith.constant 0 : index
    %c0_26 = arith.constant 0 : index
    %52 = vector.load %arg11[%c0_24, %c0_25, %c0_26] : memref<4x4x1xf32, #tpu.memory_space<vmem>>, vector<1x4x1xf32>
    %53 = vector.shape_cast %52 : vector<1x4x1xf32> to vector<4x1xf32>
    %54 = vector.broadcast %53 : vector<4x1xf32> to vector<4x256xf32>
    %55 = arith.addf %51, %54 : vector<4x256xf32>
    %c0_27 = arith.constant 0 : index
    %c0_28 = arith.constant 0 : index
    %c0_29 = arith.constant 0 : index
    %56 = vector.load %arg12[%c0_27, %c0_28, %c0_29] : memref<1x4x256xf32, #tpu.memory_space<vmem>>, vector<1x1x256xf32>
    %57 = vector.shape_cast %56 : vector<1x1x256xf32> to vector<1x256xf32>
    %58 = vector.shape_cast %57 : vector<1x256xf32> to vector<1x256xf32>
    %59 = vector.broadcast %58 : vector<1x256xf32> to vector<4x256xf32>
    %c0_30 = arith.constant 0 : index
    %c0_31 = arith.constant 0 : index
    %c0_32 = arith.constant 0 : index
    %60 = vector.load %arg13[%c0_30, %c0_31, %c0_32] : memref<1x4x256xf32, #tpu.memory_space<vmem>>, vector<1x1x256xf32>
    %61 = vector.shape_cast %60 : vector<1x1x256xf32> to vector<1x256xf32>
    %62 = vector.shape_cast %61 : vector<1x256xf32> to vector<1x256xf32>
    %63 = vector.broadcast %62 : vector<1x256xf32> to vector<4x256xf32>
    %64 = arith.mulf %59, %48 : vector<4x256xf32>
    %65 = arith.addf %40, %64 : vector<4x256xf32>
    %66 = arith.mulf %63, %55 : vector<4x256xf32>
    %67 = arith.subf %65, %66 : vector<4x256xf32>
    %68 = arith.mulf %59, %55 : vector<4x256xf32>
    %69 = arith.addf %41, %68 : vector<4x256xf32>
    %70 = arith.mulf %63, %48 : vector<4x256xf32>
    %71 = arith.addf %69, %70 : vector<4x256xf32>
    %c1_33 = arith.constant 1 : index
    %c0_34 = arith.constant 0 : index
    %c0_35 = arith.constant 0 : index
    %72 = vector.load %arg6[%c1_33, %c0_34, %c0_35] : memref<4x4x8xf32, #tpu.memory_space<vmem>>, vector<1x4x8xf32>
    %73 = vector.shape_cast %72 : vector<1x4x8xf32> to vector<4x8xf32>
    %cst_36 = arith.constant dense<0.000000e+00> : vector<4x256xf32>
    %74 = tpu.matmul %73, %20, %cst_36 {dimension_numbers = #tpu.dot_dimension_numbers<[1], [0], [0], [1], [0, 0, 1, 1], [], []>} : vector<4x8xf32>, vector<8x256xf32>, vector<4x256xf32> -> vector<4x256xf32>
    %c1_37 = arith.constant 1 : index
    %c0_38 = arith.constant 0 : index
    %c0_39 = arith.constant 0 : index
    %75 = vector.load %arg7[%c1_37, %c0_38, %c0_39] : memref<4x4x1xf32, #tpu.memory_space<vmem>>, vector<1x4x1xf32>
    %76 = vector.shape_cast %75 : vector<1x4x1xf32> to vector<4x1xf32>
    %77 = vector.broadcast %76 : vector<4x1xf32> to vector<4x256xf32>
    %78 = arith.addf %74, %77 : vector<4x256xf32>
    %c1_40 = arith.constant 1 : index
    %c0_41 = arith.constant 0 : index
    %c0_42 = arith.constant 0 : index
    %79 = vector.load %arg10[%c1_40, %c0_41, %c0_42] : memref<4x4x8xf32, #tpu.memory_space<vmem>>, vector<1x4x8xf32>
    %80 = vector.shape_cast %79 : vector<1x4x8xf32> to vector<4x8xf32>
    %cst_43 = arith.constant dense<0.000000e+00> : vector<4x256xf32>
    %81 = tpu.matmul %80, %39, %cst_43 {dimension_numbers = #tpu.dot_dimension_numbers<[1], [0], [0], [1], [0, 0, 1, 1], [], []>} : vector<4x8xf32>, vector<8x256xf32>, vector<4x256xf32> -> vector<4x256xf32>
    %c1_44 = arith.constant 1 : index
    %c0_45 = arith.constant 0 : index
    %c0_46 = arith.constant 0 : index
    %82 = vector.load %arg11[%c1_44, %c0_45, %c0_46] : memref<4x4x1xf32, #tpu.memory_space<vmem>>, vector<1x4x1xf32>
    %83 = vector.shape_cast %82 : vector<1x4x1xf32> to vector<4x1xf32>
    %84 = vector.broadcast %83 : vector<4x1xf32> to vector<4x256xf32>
    %85 = arith.addf %81, %84 : vector<4x256xf32>
    %c0_47 = arith.constant 0 : index
    %c1_48 = arith.constant 1 : index
    %c0_49 = arith.constant 0 : index
    %86 = vector.load %arg12[%c0_47, %c1_48, %c0_49] : memref<1x4x256xf32, #tpu.memory_space<vmem>>, vector<1x1x256xf32>
    %87 = vector.shape_cast %86 : vector<1x1x256xf32> to vector<1x256xf32>
    %88 = vector.shape_cast %87 : vector<1x256xf32> to vector<1x256xf32>
    %89 = vector.broadcast %88 : vector<1x256xf32> to vector<4x256xf32>
    %c0_50 = arith.constant 0 : index
    %c1_51 = arith.constant 1 : index
    %c0_52 = arith.constant 0 : index
    %90 = vector.load %arg13[%c0_50, %c1_51, %c0_52] : memref<1x4x256xf32, #tpu.memory_space<vmem>>, vector<1x1x256xf32>
    %91 = vector.shape_cast %90 : vector<1x1x256xf32> to vector<1x256xf32>
    %92 = vector.shape_cast %91 : vector<1x256xf32> to vector<1x256xf32>
    %93 = vector.broadcast %92 : vector<1x256xf32> to vector<4x256xf32>
    %94 = arith.mulf %89, %78 : vector<4x256xf32>
    %95 = arith.addf %67, %94 : vector<4x256xf32>
    %96 = arith.mulf %93, %85 : vector<4x256xf32>
    %97 = arith.subf %95, %96 : vector<4x256xf32>
    %98 = arith.mulf %89, %85 : vector<4x256xf32>
    %99 = arith.addf %71, %98 : vector<4x256xf32>
    %100 = arith.mulf %93, %78 : vector<4x256xf32>
    %101 = arith.addf %99, %100 : vector<4x256xf32>
    %c2 = arith.constant 2 : index
    %c0_53 = arith.constant 0 : index
    %c0_54 = arith.constant 0 : index
    %102 = vector.load %arg6[%c2, %c0_53, %c0_54] : memref<4x4x8xf32, #tpu.memory_space<vmem>>, vector<1x4x8xf32>
    %103 = vector.shape_cast %102 : vector<1x4x8xf32> to vector<4x8xf32>
    %cst_55 = arith.constant dense<0.000000e+00> : vector<4x256xf32>
    %104 = tpu.matmul %103, %20, %cst_55 {dimension_numbers = #tpu.dot_dimension_numbers<[1], [0], [0], [1], [0, 0, 1, 1], [], []>} : vector<4x8xf32>, vector<8x256xf32>, vector<4x256xf32> -> vector<4x256xf32>
    %c2_56 = arith.constant 2 : index
    %c0_57 = arith.constant 0 : index
    %c0_58 = arith.constant 0 : index
    %105 = vector.load %arg7[%c2_56, %c0_57, %c0_58] : memref<4x4x1xf32, #tpu.memory_space<vmem>>, vector<1x4x1xf32>
    %106 = vector.shape_cast %105 : vector<1x4x1xf32> to vector<4x1xf32>
    %107 = vector.broadcast %106 : vector<4x1xf32> to vector<4x256xf32>
    %108 = arith.addf %104, %107 : vector<4x256xf32>
    %c2_59 = arith.constant 2 : index
    %c0_60 = arith.constant 0 : index
    %c0_61 = arith.constant 0 : index
    %109 = vector.load %arg10[%c2_59, %c0_60, %c0_61] : memref<4x4x8xf32, #tpu.memory_space<vmem>>, vector<1x4x8xf32>
    %110 = vector.shape_cast %109 : vector<1x4x8xf32> to vector<4x8xf32>
    %cst_62 = arith.constant dense<0.000000e+00> : vector<4x256xf32>
    %111 = tpu.matmul %110, %39, %cst_62 {dimension_numbers = #tpu.dot_dimension_numbers<[1], [0], [0], [1], [0, 0, 1, 1], [], []>} : vector<4x8xf32>, vector<8x256xf32>, vector<4x256xf32> -> vector<4x256xf32>
    %c2_63 = arith.constant 2 : index
    %c0_64 = arith.constant 0 : index
    %c0_65 = arith.constant 0 : index
    %112 = vector.load %arg11[%c2_63, %c0_64, %c0_65] : memref<4x4x1xf32, #tpu.memory_space<vmem>>, vector<1x4x1xf32>
    %113 = vector.shape_cast %112 : vector<1x4x1xf32> to vector<4x1xf32>
    %114 = vector.broadcast %113 : vector<4x1xf32> to vector<4x256xf32>
    %115 = arith.addf %111, %114 : vector<4x256xf32>
    %c0_66 = arith.constant 0 : index
    %c2_67 = arith.constant 2 : index
    %c0_68 = arith.constant 0 : index
    %116 = vector.load %arg12[%c0_66, %c2_67, %c0_68] : memref<1x4x256xf32, #tpu.memory_space<vmem>>, vector<1x1x256xf32>
    %117 = vector.shape_cast %116 : vector<1x1x256xf32> to vector<1x256xf32>
    %118 = vector.shape_cast %117 : vector<1x256xf32> to vector<1x256xf32>
    %119 = vector.broadcast %118 : vector<1x256xf32> to vector<4x256xf32>
    %c0_69 = arith.constant 0 : index
    %c2_70 = arith.constant 2 : index
    %c0_71 = arith.constant 0 : index
    %120 = vector.load %arg13[%c0_69, %c2_70, %c0_71] : memref<1x4x256xf32, #tpu.memory_space<vmem>>, vector<1x1x256xf32>
    %121 = vector.shape_cast %120 : vector<1x1x256xf32> to vector<1x256xf32>
    %122 = vector.shape_cast %121 : vector<1x256xf32> to vector<1x256xf32>
    %123 = vector.broadcast %122 : vector<1x256xf32> to vector<4x256xf32>
    %124 = arith.mulf %119, %108 : vector<4x256xf32>
    %125 = arith.addf %97, %124 : vector<4x256xf32>
    %126 = arith.mulf %123, %115 : vector<4x256xf32>
    %127 = arith.subf %125, %126 : vector<4x256xf32>
    %128 = arith.mulf %119, %115 : vector<4x256xf32>
    %129 = arith.addf %101, %128 : vector<4x256xf32>
    %130 = arith.mulf %123, %108 : vector<4x256xf32>
    %131 = arith.addf %129, %130 : vector<4x256xf32>
    %c3 = arith.constant 3 : index
    %c0_72 = arith.constant 0 : index
    %c0_73 = arith.constant 0 : index
    %132 = vector.load %arg6[%c3, %c0_72, %c0_73] : memref<4x4x8xf32, #tpu.memory_space<vmem>>, vector<1x4x8xf32>
    %133 = vector.shape_cast %132 : vector<1x4x8xf32> to vector<4x8xf32>
    %cst_74 = arith.constant dense<0.000000e+00> : vector<4x256xf32>
    %134 = tpu.matmul %133, %20, %cst_74 {dimension_numbers = #tpu.dot_dimension_numbers<[1], [0], [0], [1], [0, 0, 1, 1], [], []>} : vector<4x8xf32>, vector<8x256xf32>, vector<4x256xf32> -> vector<4x256xf32>
    %c3_75 = arith.constant 3 : index
    %c0_76 = arith.constant 0 : index
    %c0_77 = arith.constant 0 : index
    %135 = vector.load %arg7[%c3_75, %c0_76, %c0_77] : memref<4x4x1xf32, #tpu.memory_space<vmem>>, vector<1x4x1xf32>
    %136 = vector.shape_cast %135 : vector<1x4x1xf32> to vector<4x1xf32>
    %137 = vector.broadcast %136 : vector<4x1xf32> to vector<4x256xf32>
    %138 = arith.addf %134, %137 : vector<4x256xf32>
    %c3_78 = arith.constant 3 : index
    %c0_79 = arith.constant 0 : index
    %c0_80 = arith.constant 0 : index
    %139 = vector.load %arg10[%c3_78, %c0_79, %c0_80] : memref<4x4x8xf32, #tpu.memory_space<vmem>>, vector<1x4x8xf32>
    %140 = vector.shape_cast %139 : vector<1x4x8xf32> to vector<4x8xf32>
    %cst_81 = arith.constant dense<0.000000e+00> : vector<4x256xf32>
    %141 = tpu.matmul %140, %39, %cst_81 {dimension_numbers = #tpu.dot_dimension_numbers<[1], [0], [0], [1], [0, 0, 1, 1], [], []>} : vector<4x8xf32>, vector<8x256xf32>, vector<4x256xf32> -> vector<4x256xf32>
    %c3_82 = arith.constant 3 : index
    %c0_83 = arith.constant 0 : index
    %c0_84 = arith.constant 0 : index
    %142 = vector.load %arg11[%c3_82, %c0_83, %c0_84] : memref<4x4x1xf32, #tpu.memory_space<vmem>>, vector<1x4x1xf32>
    %143 = vector.shape_cast %142 : vector<1x4x1xf32> to vector<4x1xf32>
    %144 = vector.broadcast %143 : vector<4x1xf32> to vector<4x256xf32>
    %145 = arith.addf %141, %144 : vector<4x256xf32>
    %c0_85 = arith.constant 0 : index
    %c3_86 = arith.constant 3 : index
    %c0_87 = arith.constant 0 : index
    %146 = vector.load %arg12[%c0_85, %c3_86, %c0_87] : memref<1x4x256xf32, #tpu.memory_space<vmem>>, vector<1x1x256xf32>
    %147 = vector.shape_cast %146 : vector<1x1x256xf32> to vector<1x256xf32>
    %148 = vector.shape_cast %147 : vector<1x256xf32> to vector<1x256xf32>
    %149 = vector.broadcast %148 : vector<1x256xf32> to vector<4x256xf32>
    %c0_88 = arith.constant 0 : index
    %c3_89 = arith.constant 3 : index
    %c0_90 = arith.constant 0 : index
    %150 = vector.load %arg13[%c0_88, %c3_89, %c0_90] : memref<1x4x256xf32, #tpu.memory_space<vmem>>, vector<1x1x256xf32>
    %151 = vector.shape_cast %150 : vector<1x1x256xf32> to vector<1x256xf32>
    %152 = vector.shape_cast %151 : vector<1x256xf32> to vector<1x256xf32>
    %153 = vector.broadcast %152 : vector<1x256xf32> to vector<4x256xf32>
    %154 = arith.mulf %149, %138 : vector<4x256xf32>
    %155 = arith.addf %127, %154 : vector<4x256xf32>
    %156 = arith.mulf %153, %145 : vector<4x256xf32>
    %157 = arith.subf %155, %156 : vector<4x256xf32>
    %158 = arith.mulf %149, %145 : vector<4x256xf32>
    %159 = arith.addf %131, %158 : vector<4x256xf32>
    %160 = arith.mulf %153, %138 : vector<4x256xf32>
    %161 = arith.addf %159, %160 : vector<4x256xf32>
    %c0_91 = arith.constant 0 : index
    %c0_92 = arith.constant 0 : index
    %c0_93 = arith.constant 0 : index
    %162 = vector.load %arg14[%c0_91, %c0_92, %c0_93] : memref<1x4x256xf32, #tpu.memory_space<vmem>>, vector<1x4x256xf32>
    %163 = vector.shape_cast %162 : vector<1x4x256xf32> to vector<4x256xf32>
    %164 = vector.shape_cast %157 : vector<4x256xf32> to vector<1x4x256xf32>
    tpu.vector_store %arg14[%c0_91, %c0_92, %c0_93], %164 {strides = array<i32>} : memref<1x4x256xf32, #tpu.memory_space<vmem>>, vector<1x4x256xf32>,
    %c0_94 = arith.constant 0 : index
    %c0_95 = arith.constant 0 : index
    %c0_96 = arith.constant 0 : index
    %165 = vector.load %arg15[%c0_94, %c0_95, %c0_96] : memref<1x4x256xf32, #tpu.memory_space<vmem>>, vector<1x4x256xf32>
    %166 = vector.shape_cast %165 : vector<1x4x256xf32> to vector<4x256xf32>
    %167 = vector.shape_cast %161 : vector<4x256xf32> to vector<1x4x256xf32>
    tpu.vector_store %arg15[%c0_94, %c0_95, %c0_96], %167 {strides = array<i32>} : memref<1x4x256xf32, #tpu.memory_space<vmem>>, vector<1x4x256xf32>,
    return
  }
  func.func @transform_0(%arg0: i32, %arg1: i32, %arg2: i32) -> (i32, i32) {
    %c0_i32 = arith.constant 0 : i32
    %c0_i32_0 = arith.constant 0 : i32
    return %c0_i32, %arg1 : i32, i32
  }
  func.func @transform_1(%arg0: i32, %arg1: i32, %arg2: i32) -> (i32, i32) {
    %c0_i32 = arith.constant 0 : i32
    %c0_i32_0 = arith.constant 0 : i32
    %c0_i32_1 = arith.constant 0 : i32
    return %c0_i32, %c0_i32_0 : i32, i32
  }
  func.func @transform_2(%arg0: i32, %arg1: i32, %arg2: i32) -> (i32, i32) {
    %c0_i32 = arith.constant 0 : i32
    %c0_i32_0 = arith.constant 0 : i32
    %c0_i32_1 = arith.constant 0 : i32
    return %c0_i32, %c0_i32_0 : i32, i32
  }
  func.func @transform_3(%arg0: i32, %arg1: i32, %arg2: i32) -> (i32, i32, i32) {
    %c0_i32 = arith.constant 0 : i32
    %c0_i32_0 = arith.constant 0 : i32
    %c0_i32_1 = arith.constant 0 : i32
    return %c0_i32, %arg2, %c0_i32_0 : i32, i32, i32
  }
  func.func @transform_4(%arg0: i32, %arg1: i32, %arg2: i32) -> (i32, i32, i32) {
    %c0_i32 = arith.constant 0 : i32
    %c0_i32_0 = arith.constant 0 : i32
    %c0_i32_1 = arith.constant 0 : i32
    return %c0_i32, %arg2, %c0_i32_0 : i32, i32, i32
  }
  func.func @transform_5(%arg0: i32, %arg1: i32, %arg2: i32) -> (i32, i32) {
    %c0_i32 = arith.constant 0 : i32
    %c0_i32_0 = arith.constant 0 : i32
    %c0_i32_1 = arith.constant 0 : i32
    return %c0_i32, %c0_i32_0 : i32, i32
  }
  func.func @transform_6(%arg0: i32, %arg1: i32, %arg2: i32) -> (i32, i32) {
    %c0_i32 = arith.constant 0 : i32
    %c0_i32_0 = arith.constant 0 : i32
    %c0_i32_1 = arith.constant 0 : i32
    return %c0_i32, %c0_i32_0 : i32, i32
  }
  func.func @transform_7(%arg0: i32, %arg1: i32, %arg2: i32) -> (i32, i32, i32) {
    %c0_i32 = arith.constant 0 : i32
    %c0_i32_0 = arith.constant 0 : i32
    %c0_i32_1 = arith.constant 0 : i32
    return %c0_i32, %arg2, %c0_i32_0 : i32, i32, i32
  }
  func.func @transform_8(%arg0: i32, %arg1: i32, %arg2: i32) -> (i32, i32, i32) {
    %c0_i32 = arith.constant 0 : i32
    %c0_i32_0 = arith.constant 0 : i32
    %c0_i32_1 = arith.constant 0 : i32
    return %c0_i32, %arg2, %c0_i32_0 : i32, i32, i32
  }
  func.func @transform_9(%arg0: i32, %arg1: i32, %arg2: i32) -> (i32, i32, i32) {
    %c0_i32 = arith.constant 0 : i32
    %c0_i32_0 = arith.constant 0 : i32
    return %arg0, %c0_i32, %arg1 : i32, i32, i32
  }
  func.func @transform_10(%arg0: i32, %arg1: i32, %arg2: i32) -> (i32, i32, i32) {
    %c0_i32 = arith.constant 0 : i32
    %c0_i32_0 = arith.constant 0 : i32
    return %arg0, %c0_i32, %arg1 : i32, i32, i32
  }
  func.func @transform_11(%arg0: i32, %arg1: i32, %arg2: i32) -> (i32, i32, i32) {
    %c0_i32 = arith.constant 0 : i32
    return %arg0, %arg2, %arg1 : i32, i32, i32
  }
  func.func @transform_12(%arg0: i32, %arg1: i32, %arg2: i32) -> (i32, i32, i32) {
    %c0_i32 = arith.constant 0 : i32
    return %arg0, %arg2, %arg1 : i32, i32, i32
  }
}

</mosaic_0001>

<llo_original>
// kernel: tpu_custom_call.1
$region0: #{tpu_custom_call.1}
  #allocation0 [shape = 'u32[]', space=smem, size = 0x4, offset = 0x4, fixed_abs, tag = 'smem constant byte address 0x4 - core index']
  #allocation1 [shape = 'u32[144,128]{1,0:T(1,128)}', space=vmem, size = 0x12000, scoped, tag = 'internal scratch']
  %s0 = inlined_call_operand.vmem [shape: f32[2,256], index: 0, kind: input, shape index: {}]
  %s1 = inlined_call_operand.vmem [shape: f32[8,2], index: 1, kind: input, shape index: {}]
  %s2 = inlined_call_operand.vmem [shape: f32[8,1], index: 2, kind: input, shape index: {}]
  %s3 = inlined_call_operand.vmem [shape: f32[4,4,8], index: 3, kind: input, shape index: {}]
  %s4 = inlined_call_operand.vmem [shape: f32[4,4,1], index: 4, kind: input, shape index: {}]
  %s5 = inlined_call_operand.vmem [shape: f32[8,2], index: 5, kind: input, shape index: {}]
  %s6 = inlined_call_operand.vmem [shape: f32[8,1], index: 6, kind: input, shape index: {}]
  %s7 = inlined_call_operand.vmem [shape: f32[4,4,8], index: 7, kind: input, shape index: {}]
  %s8 = inlined_call_operand.vmem [shape: f32[4,4,1], index: 8, kind: input, shape index: {}]
  %s9 = inlined_call_operand.vmem [shape: f32[2,4,256], index: 9, kind: input, shape index: {}]
  %s10 = inlined_call_operand.vmem [shape: f32[2,4,256], index: 10, kind: input, shape index: {}]
  %s11 = inlined_call_operand.hbm [shape: f32[2,4,256], index: 11, kind: output, shape index: {0}]
  %s12 = inlined_call_operand.hbm [shape: f32[2,4,256], index: 12, kind: output, shape index: {1}]
  %13 = xla_tuple %s11, %s12
  %s14 = sld [smem:[#allocation0]]
  $region85: #{tpu_custom_call.1} parent=0
    _
  %s16 = ssub.s32 1, %s14
  %s17 = scalar_select 0, %s16, %s14
  $region1: #{tpu_custom_call.1} parent=0
    #allocation2 [shape = 'u8[8192]{0}', space=vmem, size = 0x2000, scoped, tag = 'output window, operand 0']
    #allocation3 [shape = 's32[2]{0}', space=sflag, size = 0x8, scoped, tag = 'scoped memory for tpu_custom_call.1']
    #allocation4 [shape = 'u8[8192]{0}', space=vmem, size = 0x2000, scoped, tag = 'output window, operand 1']
    #allocation5 [shape = 's32[2]{0}', space=sflag, size = 0x8, scoped, tag = 'scoped memory for tpu_custom_call.1']
    %18 = vsyncpa [#allocation3], 0
    %s19 = scalar_lea.sflag [#allocation3], 1
    %20 = vsyncpa %s19, 0
    %21 = vsyncpa [#allocation5], 0
    %s22 = scalar_lea.sflag [#allocation5], 1
    %23 = vsyncpa %s22, 0
    loop: start=0, step=1, limit=4
    $region2: #{tpu_custom_call.1} parent=1 // loop_pre_header
      _
    $region3: #{tpu_custom_call.1} parent=1 // loop_header
      %s25 = sphi 0, %s29
      %p26 = scmp.ge.s32.totalorder %s25, 4
      %s32 = sphi 0, %s51
      %s33 = sphi 0, %s47
      %s34 = sphi 0, %s43
      %s35 = sphi 0, %s32
      %s36 = sphi 0, %s33
      %s37 = sphi 0, %s34
      %s38 = sphi 0, %s35
      %s39 = sphi 0, %s36
      %s40 = sphi 0, %s37
      %s54 = sphi 0, %s56
      %s57 = sphi 0, %s54
      %s58 = sphi 0, %s57
      %s74 = sphi 0, %s58
      %s78 = sphi 0, %s78
      %s80 = sphi 0, %s78
      %s81 = sphi 0, %s80
      %s95 = sphi 0, %s81
      %s99 = sphi 0, %s99
      %s101 = sphi 0, %s99
      %s102 = sphi 0, %s101
      %s116 = sphi 0, %s102
      %s122 = sphi 0, %s124
      %s125 = sphi 0, %s122
      %s126 = sphi 0, %s125
      %s142 = sphi 0, %s126
      %s148 = sphi 0, %s150
      %s151 = sphi 0, %s148
      %s152 = sphi 0, %s151
      %s168 = sphi 0, %s152
      %s172 = sphi 0, %s172
      %s174 = sphi 0, %s172
      %s175 = sphi 0, %s174
      %s189 = sphi 0, %s175
      %s193 = sphi 0, %s193
      %s195 = sphi 0, %s193
      %s196 = sphi 0, %s195
      %s210 = sphi 0, %s196
      %s216 = sphi 0, %s218
      %s219 = sphi 0, %s216
      %s220 = sphi 0, %s219
      %s236 = sphi 0, %s220
      %s242 = sphi 0, %s244
      %s245 = sphi 0, %s242
      %s246 = sphi 0, %s245
      %s262 = sphi 0, %s246
      %s270 = sphi 0, %s272
      %s273 = sphi 0, %s270
      %s274 = sphi 0, %s273
      %s290 = sphi 0, %s274
      %s298 = sphi 0, %s300
      %s301 = sphi 0, %s298
      %s302 = sphi 0, %s301
      %s318 = sphi 0, %s302
      %s328 = sphi 0, %s330
      %s331 = sphi 0, %s328
      %s332 = sphi 0, %s331
      %s348 = sphi 0, %s332
      %s358 = sphi 0, %s360
      %s361 = sphi 0, %s358
      %s362 = sphi 0, %s361
      %s378 = sphi 0, %s362
    $region4: #{tpu_custom_call.1} parent=1 // loop_header_branch
      %28 = sbr.rel (%p26) target = $region8
    $region5: #{tpu_custom_call.1} parent=1 // loop_body
      %s30 = ssub.s32 %s25, 1
      %s31 = ssub.s32 %s25, 2
      %s41 = sadd.s32 1, %s34
      %p42 = scmp.ge.s32.totalorder %s41, 1
      %s43 = scalar_select %p42, 0, %s41
      %s44 = sadd.s32 1, %s33
      %s45 = scalar_select %p42, %s44, %s33
      %p46 = scmp.ge.s32.totalorder %s45, 1
      %s47 = scalar_select %p46, 0, %s45
      %s48 = sadd.s32 1, %s32
      %s49 = scalar_select %p46, %s48, %s32
      %p50 = scmp.ge.s32.totalorder %s49, 2
      %s51 = scalar_select %p50, 0, %s49
      %s52 = ssub.s32 %s33, %s47
      %p53 = scmp.eq.s32.totalorder %s52, 0
      %s55 = sadd.s32 %s54, 1
      %s56 = scalar_select %p53, %s54, %s55
      %p59 = pneg %p53
      %p60 = scmp.eq.s32.totalorder %s25, 1
      %p61 = por %p59, %p60
      %p62 = scmp.ne.s32.totalorder %s54, %s57
      %p63 = scmp.eq.s32.totalorder %s25, 0
      %p64 = por %p62, %p63
      %p65 = scmp.ne.s32.totalorder %s54, %s57
      %p66 = scmp.eq.s32.totalorder %s30, 1
      %p67 = por %p65, %p66
      %p68 = scmp.ne.s32.totalorder %s57, %s58
      %p69 = scmp.eq.s32.totalorder %s30, 0
      %p70 = por %p68, %p69
      %p71 = scmp.ne.s32.totalorder %s57, %s58
      %p72 = scmp.eq.s32.totalorder %s31, 1
      %p73 = por %p71, %p72
      %p75 = scmp.ne.s32.totalorder %s58, %s74
      %p76 = scmp.eq.s32.totalorder %s31, 0
      %p77 = por %p75, %p76
      %s79 = sadd.s32 %s78, 1
      %p82 = scmp.eq.s32.totalorder %s25, 1
      %p83 = scmp.ne.s32.totalorder %s78, %s80
      %p84 = scmp.eq.s32.totalorder %s25, 0
      %p85 = por %p83, %p84
      %p86 = scmp.ne.s32.totalorder %s78, %s80
      %p87 = scmp.eq.s32.totalorder %s30, 1
      %p88 = por %p86, %p87
      %p89 = scmp.ne.s32.totalorder %s80, %s81
      %p90 = scmp.eq.s32.totalorder %s30, 0
      %p91 = por %p89, %p90
      %p92 = scmp.ne.s32.totalorder %s80, %s81
      %p93 = scmp.eq.s32.totalorder %s31, 1
      %p94 = por %p92, %p93
      %p96 = scmp.ne.s32.totalorder %s81, %s95
      %p97 = scmp.eq.s32.totalorder %s31, 0
      %p98 = por %p96, %p97
      %s100 = sadd.s32 %s99, 1
      %p103 = scmp.eq.s32.totalorder %s25, 1
      %p104 = scmp.ne.s32.totalorder %s99, %s101
      %p105 = scmp.eq.s32.totalorder %s25, 0
      %p106 = por %p104, %p105
      %p107 = scmp.ne.s32.totalorder %s99, %s101
      %p108 = scmp.eq.s32.totalorder %s30, 1
      %p109 = por %p107, %p108
      %p110 = scmp.ne.s32.totalorder %s101, %s102
      %p111 = scmp.eq.s32.totalorder %s30, 0
      %p112 = por %p110, %p111
      %p113 = scmp.ne.s32.totalorder %s101, %s102
      %p114 = scmp.eq.s32.totalorder %s31, 1
      %p115 = por %p113, %p114
      %p117 = scmp.ne.s32.totalorder %s102, %s116
      %p118 = scmp.eq.s32.totalorder %s31, 0
      %p119 = por %p117, %p118
      %s120 = ssub.s32 %s34, %s43
      %p121 = scmp.eq.s32.totalorder %s120, 0
      %s123 = sadd.s32 %s122, 1
      %s124 = scalar_select %p121, %s122, %s123
      %p127 = pneg %p121
      %p128 = scmp.eq.s32.totalorder %s25, 1
      %p129 = por %p127, %p128
      %p130 = scmp.ne.s32.totalorder %s122, %s125
      %p131 = scmp.eq.s32.totalorder %s25, 0
      %p132 = por %p130, %p131
      %p133 = scmp.ne.s32.totalorder %s122, %s125
      %p134 = scmp.eq.s32.totalorder %s30, 1
      %p135 = por %p133, %p134
      %p136 = scmp.ne.s32.totalorder %s125, %s126
      %p137 = scmp.eq.s32.totalorder %s30, 0
      %p138 = por %p136, %p137
      %p139 = scmp.ne.s32.totalorder %s125, %s126
      %p140 = scmp.eq.s32.totalorder %s31, 1
      %p141 = por %p139, %p140
      %p143 = scmp.ne.s32.totalorder %s126, %s142
      %p144 = scmp.eq.s32.totalorder %s31, 0
      %p145 = por %p143, %p144
      %s146 = ssub.s32 %s34, %s43
      %p147 = scmp.eq.s32.totalorder %s146, 0
      %s149 = sadd.s32 %s148, 1
      %s150 = scalar_select %p147, %s148, %s149
      %p153 = pneg %p147
      %p154 = scmp.eq.s32.totalorder %s25, 1
      %p155 = por %p153, %p154
      %p156 = scmp.ne.s32.totalorder %s148, %s151
      %p157 = scmp.eq.s32.totalorder %s25, 0
      %p158 = por %p156, %p157
      %p159 = scmp.ne.s32.totalorder %s148, %s151
      %p160 = scmp.eq.s32.totalorder %s30, 1
      %p161 = por %p159, %p160
      %p162 = scmp.ne.s32.totalorder %s151, %s152
      %p163 = scmp.eq.s32.totalorder %s30, 0
      %p164 = por %p162, %p163
      %p165 = scmp.ne.s32.totalorder %s151, %s152
      %p166 = scmp.eq.s32.totalorder %s31, 1
      %p167 = por %p165, %p166
      %p169 = scmp.ne.s32.totalorder %s152, %s168
      %p170 = scmp.eq.s32.totalorder %s31, 0
      %p171 = por %p169, %p170
      %s173 = sadd.s32 %s172, 1
      %p176 = scmp.eq.s32.totalorder %s25, 1
      %p177 = scmp.ne.s32.totalorder %s172, %s174
      %p178 = scmp.eq.s32.totalorder %s25, 0
      %p179 = por %p177, %p178
      %p180 = scmp.ne.s32.totalorder %s172, %s174
      %p181 = scmp.eq.s32.totalorder %s30, 1
      %p182 = por %p180, %p181
      %p183 = scmp.ne.s32.totalorder %s174, %s175
      %p184 = scmp.eq.s32.totalorder %s30, 0
      %p185 = por %p183, %p184
      %p186 = scmp.ne.s32.totalorder %s174, %s175
      %p187 = scmp.eq.s32.totalorder %s31, 1
      %p188 = por %p186, %p187
      %p190 = scmp.ne.s32.totalorder %s175, %s189
      %p191 = scmp.eq.s32.totalorder %s31, 0
      %p192 = por %p190, %p191
      %s194 = sadd.s32 %s193, 1
      %p197 = scmp.eq.s32.totalorder %s25, 1
      %p198 = scmp.ne.s32.totalorder %s193, %s195
      %p199 = scmp.eq.s32.totalorder %s25, 0
      %p200 = por %p198, %p199
      %p201 = scmp.ne.s32.totalorder %s193, %s195
      %p202 = scmp.eq.s32.totalorder %s30, 1
      %p203 = por %p201, %p202
      %p204 = scmp.ne.s32.totalorder %s195, %s196
      %p205 = scmp.eq.s32.totalorder %s30, 0
      %p206 = por %p204, %p205
      %p207 = scmp.ne.s32.totalorder %s195, %s196
      %p208 = scmp.eq.s32.totalorder %s31, 1
      %p209 = por %p207, %p208
      %p211 = scmp.ne.s32.totalorder %s196, %s210
      %p212 = scmp.eq.s32.totalorder %s31, 0
      %p213 = por %p211, %p212
      %s214 = ssub.s32 %s34, %s43
      %p215 = scmp.eq.s32.totalorder %s214, 0
      %s217 = sadd.s32 %s216, 1
      %s218 = scalar_select %p215, %s216, %s217
      %p221 = pneg %p215
      %p222 = scmp.eq.s32.totalorder %s25, 1
      %p223 = por %p221, %p222
      %p224 = scmp.ne.s32.totalorder %s216, %s219
      %p225 = scmp.eq.s32.totalorder %s25, 0
      %p226 = por %p224, %p225
      %p227 = scmp.ne.s32.totalorder %s216, %s219
      %p228 = scmp.eq.s32.totalorder %s30, 1
      %p229 = por %p227, %p228
      %p230 = scmp.ne.s32.totalorder %s219, %s220
      %p231 = scmp.eq.s32.totalorder %s30, 0
      %p232 = por %p230, %p231
      %p233 = scmp.ne.s32.totalorder %s219, %s220
      %p234 = scmp.eq.s32.totalorder %s31, 1
      %p235 = por %p233, %p234
      %p237 = scmp.ne.s32.totalorder %s220, %s236
      %p238 = scmp.eq.s32.totalorder %s31, 0
      %p239 = por %p237, %p238
      %s240 = ssub.s32 %s34, %s43
      %p241 = scmp.eq.s32.totalorder %s240, 0
      %s243 = sadd.s32 %s242, 1
      %s244 = scalar_select %p241, %s242, %s243
      %p247 = pneg %p241
      %p248 = scmp.eq.s32.totalorder %s25, 1
      %p249 = por %p247, %p248
      %p250 = scmp.ne.s32.totalorder %s242, %s245
      %p251 = scmp.eq.s32.totalorder %s25, 0
      %p252 = por %p250, %p251
      %p253 = scmp.ne.s32.totalorder %s242, %s245
      %p254 = scmp.eq.s32.totalorder %s30, 1
      %p255 = por %p253, %p254
      %p256 = scmp.ne.s32.totalorder %s245, %s246
      %p257 = scmp.eq.s32.totalorder %s30, 0
      %p258 = por %p256, %p257
      %p259 = scmp.ne.s32.totalorder %s245, %s246
      %p260 = scmp.eq.s32.totalorder %s31, 1
      %p261 = por %p259, %p260
      %p263 = scmp.ne.s32.totalorder %s246, %s262
      %p264 = scmp.eq.s32.totalorder %s31, 0
      %p265 = por %p263, %p264
      %s266 = ssub.s32 %s32, %s51
      %s267 = ssub.s32 %s33, %s47
      %s268 = sor.u32 %s266, %s267
      %p269 = scmp.eq.s32.totalorder %s268, 0
      %s271 = sadd.s32 %s270, 1
      %s272 = scalar_select %p269, %s270, %s271
      %p275 = pneg %p269
      %p276 = scmp.eq.s32.totalorder %s25, 1
      %p277 = por %p275, %p276
      %p278 = scmp.ne.s32.totalorder %s270, %s273
      %p279 = scmp.eq.s32.totalorder %s25, 0
      %p280 = por %p278, %p279
      %p281 = scmp.ne.s32.totalorder %s270, %s273
      %p282 = scmp.eq.s32.totalorder %s30, 1
      %p283 = por %p281, %p282
      %p284 = scmp.ne.s32.totalorder %s273, %s274
      %p285 = scmp.eq.s32.totalorder %s30, 0
      %p286 = por %p284, %p285
      %p287 = scmp.ne.s32.totalorder %s273, %s274
      %p288 = scmp.eq.s32.totalorder %s31, 1
      %p289 = por %p287, %p288
      %p291 = scmp.ne.s32.totalorder %s274, %s290
      %p292 = scmp.eq.s32.totalorder %s31, 0
      %p293 = por %p291, %p292
      %s294 = ssub.s32 %s32, %s51
      %s295 = ssub.s32 %s33, %s47
      %s296 = sor.u32 %s294, %s295
      %p297 = scmp.eq.s32.totalorder %s296, 0
      %s299 = sadd.s32 %s298, 1
      %s300 = scalar_select %p297, %s298, %s299
      %p303 = pneg %p297
      %p304 = scmp.eq.s32.totalorder %s25, 1
      %p305 = por %p303, %p304
      %p306 = scmp.ne.s32.totalorder %s298, %s301
      %p307 = scmp.eq.s32.totalorder %s25, 0
      %p308 = por %p306, %p307
      %p309 = scmp.ne.s32.totalorder %s298, %s301
      %p310 = scmp.eq.s32.totalorder %s30, 1
      %p311 = por %p309, %p310
      %p312 = scmp.ne.s32.totalorder %s301, %s302
      %p313 = scmp.eq.s32.totalorder %s30, 0
      %p314 = por %p312, %p313
      %p315 = scmp.ne.s32.totalorder %s301, %s302
      %p316 = scmp.eq.s32.totalorder %s31, 1
      %p317 = por %p315, %p316
      %p319 = scmp.ne.s32.totalorder %s302, %s318
      %p320 = scmp.eq.s32.totalorder %s31, 0
      %p321 = por %p319, %p320
      %s322 = ssub.s32 %s32, %s51
      %s323 = ssub.s32 %s34, %s43
      %s324 = sor.u32 %s322, %s323
      %s325 = ssub.s32 %s33, %s47
      %s326 = sor.u32 %s324, %s325
      %p327 = scmp.eq.s32.totalorder %s326, 0
      %s329 = sadd.s32 %s328, 1
      %s330 = scalar_select %p327, %s328, %s329
      %p333 = pneg %p327
      %p334 = scmp.eq.s32.totalorder %s25, 1
      %p335 = por %p333, %p334
      %p336 = scmp.ne.s32.totalorder %s328, %s331
      %p337 = scmp.eq.s32.totalorder %s25, 0
      %p338 = por %p336, %p337
      %p339 = scmp.ne.s32.totalorder %s328, %s331
      %p340 = scmp.eq.s32.totalorder %s30, 1
      %p341 = por %p339, %p340
      %p342 = scmp.ne.s32.totalorder %s331, %s332
      %p343 = scmp.eq.s32.totalorder %s30, 0
      %p344 = por %p342, %p343
      %p345 = scmp.ne.s32.totalorder %s331, %s332
      %p346 = scmp.eq.s32.totalorder %s31, 1
      %p347 = por %p345, %p346
      %p349 = scmp.ne.s32.totalorder %s332, %s348
      %p350 = scmp.eq.s32.totalorder %s31, 0
      %p351 = por %p349, %p350
      %s352 = ssub.s32 %s32, %s51
      %s353 = ssub.s32 %s34, %s43
      %s354 = sor.u32 %s352, %s353
      %s355 = ssub.s32 %s33, %s47
      %s356 = sor.u32 %s354, %s355
      %p357 = scmp.eq.s32.totalorder %s356, 0
      %s359 = sadd.s32 %s358, 1
      %s360 = scalar_select %p357, %s358, %s359
      %p363 = pneg %p357
      %p364 = scmp.eq.s32.totalorder %s25, 1
      %p365 = por %p363, %p364
      %p366 = scmp.ne.s32.totalorder %s358, %s361
      %p367 = scmp.eq.s32.totalorder %s25, 0
      %p368 = por %p366, %p367
      %p369 = scmp.ne.s32.totalorder %s358, %s361
      %p370 = scmp.eq.s32.totalorder %s30, 1
      %p371 = por %p369, %p370
      %p372 = scmp.ne.s32.totalorder %s361, %s362
      %p373 = scmp.eq.s32.totalorder %s30, 0
      %p374 = por %p372, %p373
      %p375 = scmp.ne.s32.totalorder %s361, %s362
      %p376 = scmp.eq.s32.totalorder %s31, 1
      %p377 = por %p375, %p376
      %p379 = scmp.ne.s32.totalorder %s362, %s378
      %p380 = scmp.eq.s32.totalorder %s31, 0
      %p381 = por %p379, %p380
      %p382 = scmp.le.s32.totalorder 1, %s25
      %p383 = scmp.lt.s32.totalorder %s25, 3
      %p384 = pnand %p382, %p383
      %p385 = pneg %p384
      // Predicated region
      $region9: #{tpu_custom_call.1} parent=5 // pred_check
        _
      $region10: #{tpu_custom_call.1} parent=5 // pred_check_branch
        %387 = sbr.rel (%p384) target = $region12
      $region11: #{tpu_custom_call.1} parent=5 // pred_region
        %s388 = ssub.s32 %s25, 1
        // Predicated region
        $region13: #{tpu_custom_call.1} parent=11 // pred_check
          %p389 = pneg %p70
        $region14: #{tpu_custom_call.1} parent=11 // pred_check_branch
          %391 = sbr.rel (%p389) target = $region16
        $region15: #{tpu_custom_call.1} parent=11 // pred_region
          %s392 = smul.u32 2, %s36
          %p393 = scmp.lt.s32.totalorder %s392, 1
          %s394 = scalar_select %p393, %s392, 1
          %s395 = smul.addr %s394, 2
          %s396 = scalar_lea.vmem %s0, %s395
          %s397 = smul.u32 2, %s36
        $region16: #{tpu_custom_call.1} parent=11 // pred_fallthru
          _
        // Predicated region
        $region17: #{tpu_custom_call.1} parent=11 // pred_check
          %p398 = pneg %p91
        $region18: #{tpu_custom_call.1} parent=11 // pred_check_branch
          %400 = sbr.rel (%p398) target = $region20
        $region19: #{tpu_custom_call.1} parent=11 // pred_region
          _
        $region20: #{tpu_custom_call.1} parent=11 // pred_fallthru
          _
        // Predicated region
        $region21: #{tpu_custom_call.1} parent=11 // pred_check
          %p401 = pneg %p112
        $region22: #{tpu_custom_call.1} parent=11 // pred_check_branch
          %403 = sbr.rel (%p401) target = $region24
        $region23: #{tpu_custom_call.1} parent=11 // pred_region
          _
        $region24: #{tpu_custom_call.1} parent=11 // pred_fallthru
          _
        // Predicated region
        $region25: #{tpu_custom_call.1} parent=11 // pred_check
          %p404 = pneg %p138
        $region26: #{tpu_custom_call.1} parent=11 // pred_check_branch
          %406 = sbr.rel (%p404) target = $region28
        $region27: #{tpu_custom_call.1} parent=11 // pred_region
          %p407 = scmp.lt.s32.totalorder %s37, 0
          %s408 = scalar_select %p407, %s37, 0
          %s409 = smul.addr %s408, 4
          %s410 = scalar_lea.vmem %s3, %s409
        $region28: #{tpu_custom_call.1} parent=11 // pred_fallthru
          _
        // Predicated region
        $region29: #{tpu_custom_call.1} parent=11 // pred_check
          %p411 = pneg %p164
        $region30: #{tpu_custom_call.1} parent=11 // pred_check_branch
          %413 = sbr.rel (%p411) target = $region32
        $region31: #{tpu_custom_call.1} parent=11 // pred_region
          %p414 = scmp.lt.s32.totalorder %s37, 0
          %s415 = scalar_select %p414, %s37, 0
          %s416 = smul.addr %s415, 4
          %s417 = scalar_lea.vmem %s4, %s416
        $region32: #{tpu_custom_call.1} parent=11 // pred_fallthru
          _
        // Predicated region
        $region33: #{tpu_custom_call.1} parent=11 // pred_check
          %p418 = pneg %p185
        $region34: #{tpu_custom_call.1} parent=11 // pred_check_branch
          %420 = sbr.rel (%p418) target = $region36
        $region35: #{tpu_custom_call.1} parent=11 // pred_region
          _
        $region36: #{tpu_custom_call.1} parent=11 // pred_fallthru
          _
        // Predicated region
        $region37: #{tpu_custom_call.1} parent=11 // pred_check
          %p421 = pneg %p206
        $region38: #{tpu_custom_call.1} parent=11 // pred_check_branch
          %423 = sbr.rel (%p421) target = $region40
        $region39: #{tpu_custom_call.1} parent=11 // pred_region
          _
        $region40: #{tpu_custom_call.1} parent=11 // pred_fallthru
          _
        // Predicated region
        $region41: #{tpu_custom_call.1} parent=11 // pred_check
          %p424 = pneg %p232
        $region42: #{tpu_custom_call.1} parent=11 // pred_check_branch
          %426 = sbr.rel (%p424) target = $region44
        $region43: #{tpu_custom_call.1} parent=11 // pred_region
          %p427 = scmp.lt.s32.totalorder %s37, 0
          %s428 = scalar_select %p427, %s37, 0
          %s429 = smul.addr %s428, 4
          %s430 = scalar_lea.vmem %s7, %s429
        $region44: #{tpu_custom_call.1} parent=11 // pred_fallthru
          _
        // Predicated region
        $region45: #{tpu_custom_call.1} parent=11 // pred_check
          %p431 = pneg %p258
        $region46: #{tpu_custom_call.1} parent=11 // pred_check_branch
          %433 = sbr.rel (%p431) target = $region48
        $region47: #{tpu_custom_call.1} parent=11 // pred_region
          %p434 = scmp.lt.s32.totalorder %s37, 0
          %s435 = scalar_select %p434, %s37, 0
          %s436 = smul.addr %s435, 4
          %s437 = scalar_lea.vmem %s8, %s436
        $region48: #{tpu_custom_call.1} parent=11 // pred_fallthru
          _
      $region12: #{tpu_custom_call.1} parent=5 // pred_fallthru
        _
      %p438 = scmp.lt.s32.totalorder %s25, 2
      // Predicated region
      $region49: #{tpu_custom_call.1} parent=5 // pred_check
        %p439 = pneg %p438
      $region50: #{tpu_custom_call.1} parent=5 // pred_check_branch
        %441 = sbr.rel (%p439) target = $region52
      $region51: #{tpu_custom_call.1} parent=5 // pred_region
        // Predicated region
        $region53: #{tpu_custom_call.1} parent=51 // pred_check
          %p442 = pneg %p280
        $region54: #{tpu_custom_call.1} parent=51 // pred_check_branch
          %444 = sbr.rel (%p442) target = $region56
        $region55: #{tpu_custom_call.1} parent=51 // pred_region
          %s445 = smul.u32 2, %s33
          %p446 = scmp.lt.s32.totalorder %s32, 1
          %s447 = scalar_select %p446, %s32, 1
          %p448 = scmp.lt.s32.totalorder %s445, 1
          %s449 = scalar_select %p448, %s445, 1
          %s450 = smul.addr %s447, 2
          %s451 = sadd.s32 %s449, %s450
          %s452 = smul.addr %s451, 4
          %s453 = scalar_lea.vmem %s9, %s452
          %s454 = smul.u32 2, %s33
        $region56: #{tpu_custom_call.1} parent=51 // pred_fallthru
          _
        // Predicated region
        $region57: #{tpu_custom_call.1} parent=51 // pred_check
          %p455 = pneg %p308
        $region58: #{tpu_custom_call.1} parent=51 // pred_check_branch
          %457 = sbr.rel (%p455) target = $region60
        $region59: #{tpu_custom_call.1} parent=51 // pred_region
          %s458 = smul.u32 2, %s33
          %p459 = scmp.lt.s32.totalorder %s32, 1
          %s460 = scalar_select %p459, %s32, 1
          %p461 = scmp.lt.s32.totalorder %s458, 1
          %s462 = scalar_select %p461, %s458, 1
          %s463 = smul.addr %s460, 2
          %s464 = sadd.s32 %s462, %s463
          %s465 = smul.addr %s464, 4
          %s466 = scalar_lea.vmem %s10, %s465
          %s467 = smul.u32 2, %s33
        $region60: #{tpu_custom_call.1} parent=51 // pred_fallthru
          _
      $region52: #{tpu_custom_call.1} parent=5 // pred_fallthru
        _
      %p468 = scmp.le.s32.totalorder 1, %s25
      %p469 = scmp.lt.s32.totalorder %s25, 3
      %p470 = pnand %p468, %p469
      %p471 = pneg %p470
      // Predicated region
      $region61: #{tpu_custom_call.1} parent=5 // pred_check
        _
      $region62: #{tpu_custom_call.1} parent=5 // pred_check_branch
        %473 = sbr.rel (%p470) target = $region64
      $region63: #{tpu_custom_call.1} parent=5 // pred_region
        %s474 = ssub.s32 %s25, 1
        %s475 = smul.u32 2, %s36
        %p476 = scmp.lt.s32.totalorder %s475, 1
        %s477 = scalar_select %p476, %s475, 1
        %s478 = smul.addr %s477, 2
        %s479 = scalar_lea.vmem %s0, %s478
        %p480 = pneg %p70
        %p481 = pneg %p67
        %p482 = pneg %p91
        %p483 = pneg %p88
        %p484 = pneg %p112
        %p485 = pneg %p109
        %p486 = scmp.lt.s32.totalorder %s37, 0
        %s487 = scalar_select %p486, %s37, 0
        %s488 = smul.addr %s487, 4
        %s489 = scalar_lea.vmem %s3, %s488
        %p490 = pneg %p138
        %p491 = pneg %p135
        %p492 = scmp.lt.s32.totalorder %s37, 0
        %s493 = scalar_select %p492, %s37, 0
        %s494 = smul.addr %s493, 4
        %s495 = scalar_lea.vmem %s4, %s494
        %p496 = pneg %p164
        %p497 = pneg %p161
        %p498 = pneg %p185
        %p499 = pneg %p182
        %p500 = pneg %p206
        %p501 = pneg %p203
        %p502 = scmp.lt.s32.totalorder %s37, 0
        %s503 = scalar_select %p502, %s37, 0
        %s504 = smul.addr %s503, 4
        %s505 = scalar_lea.vmem %s7, %s504
        %p506 = pneg %p232
        %p507 = pneg %p229
        %p508 = scmp.lt.s32.totalorder %s37, 0
        %s509 = scalar_select %p508, %s37, 0
        %s510 = smul.addr %s509, 4
        %s511 = scalar_lea.vmem %s8, %s510
        %p512 = pneg %p258
        %p513 = pneg %p255
        %s514 = smul.u32 2, %s36
        %p515 = scmp.lt.s32.totalorder %s35, 1
        %s516 = scalar_select %p515, %s35, 1
        %p517 = scmp.lt.s32.totalorder %s514, 1
        %s518 = scalar_select %p517, %s514, 1
        %s519 = smul.addr %s516, 2
        %s520 = sadd.s32 %s518, %s519
        %s521 = smul.addr %s520, 4
        %s522 = scalar_lea.vmem %s9, %s521
        %p523 = pneg %p286
        %p524 = pneg %p283
        %s525 = smul.u32 2, %s36
        %p526 = scmp.lt.s32.totalorder %s35, 1
        %s527 = scalar_select %p526, %s35, 1
        %p528 = scmp.lt.s32.totalorder %s525, 1
        %s529 = scalar_select %p528, %s525, 1
        %s530 = smul.addr %s527, 2
        %s531 = sadd.s32 %s529, %s530
        %s532 = smul.addr %s531, 4
        %s533 = scalar_lea.vmem %s10, %s532
        %p534 = pneg %p314
        %p535 = pneg %p311
        %p536 = pneg %p344
        %p537 = pneg %p341
        %s538 = sand.u32 %s331, 1
        %s539 = scalar_lea.sflag [#allocation3], %s538
        %s540 = sand.u32 %s331, 1
        %s541 = smul.addr %s540, 8
        %s542 = scalar_lea.vmem [#allocation2], %s541
        %p543 = pneg %p374
        %p544 = pneg %p371
        %s545 = sand.u32 %s361, 1
        %s546 = scalar_lea.sflag [#allocation5], %s545
        %s547 = sand.u32 %s361, 1
        %s548 = smul.addr %s547, 8
        %s549 = scalar_lea.vmem [#allocation4], %s548
        %s550 = smul.u32 2, %s36
        %p551 = scmp.lt.s32.totalorder %s550, 1
        %s552 = scalar_select %p551, %s550, 1
        %s553 = smul.addr %s552, 2
        %s554 = scalar_lea.vmem %s0, %s553
        %s555 = smul.u32 2, %s36
        %p556 = scmp.lt.s32.totalorder %s37, 0
        %s557 = scalar_select %p556, %s37, 0
        %s558 = smul.addr %s557, 4
        %s559 = scalar_lea.vmem %s3, %s558
        %p560 = scmp.lt.s32.totalorder %s37, 0
        %s561 = scalar_select %p560, %s37, 0
        %s562 = smul.addr %s561, 4
        %s563 = scalar_lea.vmem %s4, %s562
        %p564 = scmp.lt.s32.totalorder %s37, 0
        %s565 = scalar_select %p564, %s37, 0
        %s566 = smul.addr %s565, 4
        %s567 = scalar_lea.vmem %s7, %s566
        %p568 = scmp.lt.s32.totalorder %s37, 0
        %s569 = scalar_select %p568, %s37, 0
        %s570 = smul.addr %s569, 4
        %s571 = scalar_lea.vmem %s8, %s570
        %s572 = smul.u32 2, %s36
        %p573 = scmp.lt.s32.totalorder %s35, 1
        %s574 = scalar_select %p573, %s35, 1
        %p575 = scmp.lt.s32.totalorder %s572, 1
        %s576 = scalar_select %p575, %s572, 1
        %s577 = smul.addr %s574, 2
        %s578 = sadd.s32 %s576, %s577
        %s579 = smul.addr %s578, 4
        %s580 = scalar_lea.vmem %s9, %s579
        %s581 = smul.u32 2, %s36
        %s582 = smul.u32 2, %s36
        %p583 = scmp.lt.s32.totalorder %s35, 1
        %s584 = scalar_select %p583, %s35, 1
        %p585 = scmp.lt.s32.totalorder %s582, 1
        %s586 = scalar_select %p585, %s582, 1
        %s587 = smul.addr %s584, 2
        %s588 = sadd.s32 %s586, %s587
        %s589 = smul.addr %s588, 4
        %s590 = scalar_lea.vmem %s10, %s589
        %s591 = smul.u32 2, %s36
        %s592 = smul.u32 2, %s36
        %s593 = smul.u32 2, %s36
        %v594 = vld [vmem:[%s554] ss:$2 sm:$0x3]
        %s595 = scalar_lea.vmem %s554, 1
        %v596 = vld [vmem:[%s595] ss:$2 sm:$0x3]
        %v597 = vld [vmem:[%s1] sm:$0xff]
        %599 = vset.pattern.permute.xlu0 0
        %600 = vperm.xlu0 %599, %v597
        %v601 = vpop.permute.xlu0 %600
        %v604 = vlaneseq
        %v605 = vshrl.u32 %v604, 7
        %v606 = vsub.s32 0, %v605
        %v607 = vrot.slane %v594, %v606
        %v608 = vlaneseq
        %v609 = vshrl.u32 %v608, 7
        %v610 = vsub.s32 1, %v609
        %v611 = vrot.slane %v594, %v610
        %v614 = vmul.f32 %v601, %v607
        %v615 = vmul.f32 %v601, %v611
        %616 = vset.pattern.permute.xlu0 1
        %617 = vperm.xlu0 %616, %v597
        %v618 = vpop.permute.xlu0 %617
        %v621 = vlaneseq
        %v622 = vshrl.u32 %v621, 7
        %v623 = vsub.s32 0, %v622
        %v624 = vrot.slane %v596, %v623
        %v625 = vlaneseq
        %v626 = vshrl.u32 %v625, 7
        %v627 = vsub.s32 1, %v626
        %v628 = vrot.slane %v596, %v627
        %v631 = vmul.f32 %v618, %v624
        %v632 = vmul.f32 %v618, %v628
        %v633 = vadd.f32 %v614, %v631
        %v634 = vadd.f32 %v615, %v632
        %v635 = vld [vmem:[%s2] sm:$0xff]
        %637 = vset.pattern.permute.xlu0 0
        %638 = vperm.xlu0 %637, %v635
        %v639 = vpop.permute.xlu0 %638
        %v641 = vadd.f32 %v633, %v639
        %v642 = vadd.f32 %v634, %v639
        %v643 = vxor.u32 %v641, 2147483648
        %v644 = vxor.u32 %v642, 2147483648
        %v645 = vmul.f32 %v643, 1.442695
        %v646 = vpow.pop %v645
        %v647 = vmul.f32 %v644, 1.442695
        %v648 = vpow.pop %v647
        %v649 = vadd.f32 %v646, 1.0
        %v650 = vadd.f32 %v648, 1.0
        %v651 = vrcp.pop %v649
        %v652 = vmul.f32 1.0, %v651
        %v653 = vrcp.pop %v650
        %v654 = vmul.f32 1.0, %v653
        %v655 = vmul.f32 %v641, %v652
        %v656 = vmul.f32 %v642, %v654
        %v657 = vld [vmem:[%s5] sm:$0xff]
        %659 = vset.pattern.permute.xlu0 0
        %660 = vperm.xlu0 %659, %v657
        %v661 = vpop.permute.xlu0 %660
        %v663 = vmul.f32 %v661, %v607
        %v664 = vmul.f32 %v661, %v611
        %665 = vset.pattern.permute.xlu0 1
        %666 = vperm.xlu0 %665, %v657
        %v667 = vpop.permute.xlu0 %666
        %v669 = vmul.f32 %v667, %v624
        %v670 = vmul.f32 %v667, %v628
        %v671 = vadd.f32 %v663, %v669
        %v672 = vadd.f32 %v664, %v670
        %v673 = vld [vmem:[%s6] sm:$0xff]
        %675 = vset.pattern.permute.xlu0 0
        %676 = vperm.xlu0 %675, %v673
        %v677 = vpop.permute.xlu0 %676
        %v679 = vadd.f32 %v671, %v677
        %v680 = vadd.f32 %v672, %v677
        %v681 = vxor.u32 %v679, 2147483648
        %v682 = vxor.u32 %v680, 2147483648
        %v683 = vmul.f32 %v681, 1.442695
        %v684 = vpow.pop %v683
        %v685 = vmul.f32 %v682, 1.442695
        %v686 = vpow.pop %v685
        %v687 = vadd.f32 %v684, 1.0
        %v688 = vadd.f32 %v686, 1.0
        %v689 = vrcp.pop %v687
        %v690 = vmul.f32 1.0, %v689
        %v691 = vrcp.pop %v688
        %v692 = vmul.f32 1.0, %v691
        %v693 = vmul.f32 %v679, %v690
        %v694 = vmul.f32 %v680, %v692
        %v695 = vld [vmem:[%s559] sm:$0xf]
        %v696 = vld [vmem:[%s563] sm:$0xf]
        %698 = vset.pattern.permute.xlu0 0
        %699 = vperm.xlu0 %698, %v696
        %v700 = vpop.permute.xlu0 %699
        %vm702 = vcmask 64512
        %v704 = vsel %vm702, %v695, 0
        %706 = vmatprep.subr.mxu0 %v656
        %707 = vmatpush1.msra.mxu0 %v655
        %708 = vmatprep.subr.mxu0 0.0
        %709 = vmatpush1.msra.mxu0 0.0
        %710 = vmatprep.subr.mxu0 0.0
        %711 = vmatpush1.msra.mxu0 0.0
        %712 = vmatprep.subr.mxu0 0.0
        %713 = vmatpush1.msra.mxu0 0.0
        %714 = vmatprep.subr.mxu0 0.0
        %715 = vmatpush1.msra.mxu0 0.0
        %716 = vmatprep.subr.mxu0 0.0
        %717 = vmatpush1.msra.mxu0 0.0
        %718 = vmatprep.subr.mxu0 0.0
        %719 = vmatpush1.msra.mxu0 0.0
        %720 = vmatprep.subr.mxu0 0.0
        %721 = vmatpush1.msra.mxu0 0.0
        %722 = vmatprep.subr.mxu0 0.0
        %723 = vmatpush1.msra.mxu0 0.0
        %724 = vmatprep.subr.mxu0 0.0
        %725 = vmatpush1.msra.mxu0 0.0
        %726 = vmatprep.subr.mxu0 0.0
        %727 = vmatpush1.msra.mxu0 0.0
        %728 = vmatprep.subr.mxu0 0.0
        %729 = vmatpush1.msra.mxu0 0.0
        %730 = vmatprep.subr.mxu0 0.0
        %731 = vmatpush1.msra.mxu0 0.0
        %732 = vmatprep.subr.mxu0 0.0
        %733 = vmatpush1.msra.mxu0 0.0
        %734 = vmatprep.subr.mxu0 0.0
        %735 = vmatpush1.msra.mxu0 0.0
        %736 = vmatprep.subr.mxu0 0.0
        %737 = vmatpush1.msra.mxu0 0.0
        %738 = vmatprep.subr.mxu0 0.0
        %739 = vmatpush1.msra.mxu0 0.0
        %740 = vmatprep.subr.mxu0 0.0
        %741 = vmatpush1.msra.mxu0 0.0
        %742 = vmatprep.subr.mxu0 0.0
        %743 = vmatpush1.msra.mxu0 0.0
        %744 = vmatprep.subr.mxu0 0.0
        %745 = vmatpush1.msra.mxu0 0.0
        %746 = vmatprep.subr.mxu0 0.0
        %747 = vmatpush1.msra.mxu0 0.0
        %748 = vmatprep.subr.mxu0 0.0
        %749 = vmatpush1.msra.mxu0 0.0
        %750 = vmatprep.subr.mxu0 0.0
        %751 = vmatpush1.msra.mxu0 0.0
        %752 = vmatprep.subr.mxu0 0.0
        %753 = vmatpush1.msra.mxu0 0.0
        %754 = vmatprep.subr.mxu0 0.0
        %755 = vmatpush1.msra.mxu0 0.0
        %756 = vmatprep.subr.mxu0 0.0
        %757 = vmatpush1.msra.mxu0 0.0
        %758 = vmatprep.subr.mxu0 0.0
        %759 = vmatpush1.msra.mxu0 0.0
        %760 = vmatprep.subr.mxu0 0.0
        %761 = vmatpush1.msra.mxu0 0.0
        %762 = vmatprep.subr.mxu0 0.0
        %763 = vmatpush1.msra.mxu0 0.0
        %764 = vmatprep.subr.mxu0 0.0
        %765 = vmatpush1.msra.mxu0 0.0
        %766 = vmatprep.subr.mxu0 0.0
        %767 = vmatpush1.msra.mxu0 0.0
        %768 = vmatprep.subr.mxu0 0.0
        %769 = vmatpush1.msra.mxu0 0.0
        %770 = vmatprep.mubr.f32.mxu0 0.0
        %771 = vmatmul.mubr.f32.gmra.mrb[0].mxu0 %v704
        %v772 = vpop.f32.mrb[0].mxu0
        %v773 = vadd.f32 %v700, %v772
        %v774 = vpop.f32.mrb[0].mxu0
        %v775 = vadd.f32 %v700, %v774
        %776 = vdwg.mxu0
        %v777 = vld [vmem:[%s567] sm:$0xf]
        %v778 = vld [vmem:[%s571] sm:$0xf]
        %780 = vset.pattern.permute.xlu0 0
        %781 = vperm.xlu0 %780, %v778
        %v782 = vpop.permute.xlu0 %781
        %v785 = vsel %vm702, %v777, 0
        %787 = vmatprep.subr.mxu0 %v694
        %788 = vmatpush1.msra.mxu0 %v693
        %789 = vmatprep.subr.mxu0 0.0
        %790 = vmatpush1.msra.mxu0 0.0
        %791 = vmatprep.subr.mxu0 0.0
        %792 = vmatpush1.msra.mxu0 0.0
        %793 = vmatprep.subr.mxu0 0.0
        %794 = vmatpush1.msra.mxu0 0.0
        %795 = vmatprep.subr.mxu0 0.0
        %796 = vmatpush1.msra.mxu0 0.0
        %797 = vmatprep.subr.mxu0 0.0
        %798 = vmatpush1.msra.mxu0 0.0
        %799 = vmatprep.subr.mxu0 0.0
        %800 = vmatpush1.msra.mxu0 0.0
        %801 = vmatprep.subr.mxu0 0.0
        %802 = vmatpush1.msra.mxu0 0.0
        %803 = vmatprep.subr.mxu0 0.0
        %804 = vmatpush1.msra.mxu0 0.0
        %805 = vmatprep.subr.mxu0 0.0
        %806 = vmatpush1.msra.mxu0 0.0
        %807 = vmatprep.subr.mxu0 0.0
        %808 = vmatpush1.msra.mxu0 0.0
        %809 = vmatprep.subr.mxu0 0.0
        %810 = vmatpush1.msra.mxu0 0.0
        %811 = vmatprep.subr.mxu0 0.0
        %812 = vmatpush1.msra.mxu0 0.0
        %813 = vmatprep.subr.mxu0 0.0
        %814 = vmatpush1.msra.mxu0 0.0
        %815 = vmatprep.subr.mxu0 0.0
        %816 = vmatpush1.msra.mxu0 0.0
        %817 = vmatprep.subr.mxu0 0.0
        %818 = vmatpush1.msra.mxu0 0.0
        %819 = vmatprep.subr.mxu0 0.0
        %820 = vmatpush1.msra.mxu0 0.0
        %821 = vmatprep.subr.mxu0 0.0
        %822 = vmatpush1.msra.mxu0 0.0
        %823 = vmatprep.subr.mxu0 0.0
        %824 = vmatpush1.msra.mxu0 0.0
        %825 = vmatprep.subr.mxu0 0.0
        %826 = vmatpush1.msra.mxu0 0.0
        %827 = vmatprep.subr.mxu0 0.0
        %828 = vmatpush1.msra.mxu0 0.0
        %829 = vmatprep.subr.mxu0 0.0
        %830 = vmatpush1.msra.mxu0 0.0
        %831 = vmatprep.subr.mxu0 0.0
        %832 = vmatpush1.msra.mxu0 0.0
        %833 = vmatprep.subr.mxu0 0.0
        %834 = vmatpush1.msra.mxu0 0.0
        %835 = vmatprep.subr.mxu0 0.0
        %836 = vmatpush1.msra.mxu0 0.0
        %837 = vmatprep.subr.mxu0 0.0
        %838 = vmatpush1.msra.mxu0 0.0
        %839 = vmatprep.subr.mxu0 0.0
        %840 = vmatpush1.msra.mxu0 0.0
        %841 = vmatprep.subr.mxu0 0.0
        %842 = vmatpush1.msra.mxu0 0.0
        %843 = vmatprep.subr.mxu0 0.0
        %844 = vmatpush1.msra.mxu0 0.0
        %845 = vmatprep.subr.mxu0 0.0
        %846 = vmatpush1.msra.mxu0 0.0
        %847 = vmatprep.subr.mxu0 0.0
        %848 = vmatpush1.msra.mxu0 0.0
        %849 = vmatprep.subr.mxu0 0.0
        %850 = vmatpush1.msra.mxu0 0.0
        %851 = vmatprep.mubr.f32.mxu0 0.0
        %852 = vmatmul.mubr.f32.gmra.mrb[0].mxu0 %v785
        %v853 = vpop.f32.mrb[0].mxu0
        %v854 = vadd.f32 %v782, %v853
        %v855 = vpop.f32.mrb[0].mxu0
        %v856 = vadd.f32 %v782, %v855
        %857 = vdwg.mxu0
        %v858 = vld [vmem:[%s580] ss:$4 sm:$0x3]
        %v860 = vlaneseq
        %v861 = vshrl.u32 %v860, 7
        %v862 = vsub.s32 0, %v861
        %v863 = vrot.slane %v858, %v862
        %v864 = vlaneseq
        %v865 = vshrl.u32 %v864, 7
        %v866 = vsub.s32 1, %v865
        %v867 = vrot.slane %v858, %v866
        %v870 = vld [vmem:[%s590] ss:$4 sm:$0x3]
        %v872 = vlaneseq
        %v873 = vshrl.u32 %v872, 7
        %v874 = vsub.s32 0, %v873
        %v875 = vrot.slane %v870, %v874
        %v876 = vlaneseq
        %v877 = vshrl.u32 %v876, 7
        %v878 = vsub.s32 1, %v877
        %v879 = vrot.slane %v870, %v878
        %v882 = vmul.f32 %v863, %v773
        %v883 = vmul.f32 %v867, %v775
        %v884 = vadd.f32 %v882, 0.0
        %v885 = vadd.f32 %v883, 0.0
        %v886 = vmul.f32 %v875, %v854
        %v887 = vmul.f32 %v879, %v856
        %v888 = vsub.f32 %v884, %v886
        %v889 = vsub.f32 %v885, %v887
        %v890 = vmul.f32 %v863, %v854
        %v891 = vmul.f32 %v867, %v856
        %v892 = vadd.f32 %v890, 0.0
        %v893 = vadd.f32 %v891, 0.0
        %v894 = vmul.f32 %v875, %v773
        %v895 = vmul.f32 %v879, %v775
        %v896 = vadd.f32 %v892, %v894
        %v897 = vadd.f32 %v893, %v895
        %s898 = scalar_lea.vmem %s559, 4
        %v899 = vld [vmem:[%s898] sm:$0xf]
        %s900 = scalar_lea.vmem %s563, 4
        %v901 = vld [vmem:[%s900] sm:$0xf]
        %903 = vset.pattern.permute.xlu0 0
        %904 = vperm.xlu0 %903, %v901
        %v905 = vpop.permute.xlu0 %904
        %v908 = vsel %vm702, %v899, 0
        %910 = vmatprep.subr.mxu0 %v656
        %911 = vmatpush1.msra.mxu0 %v655
        %912 = vmatprep.subr.mxu0 0.0
        %913 = vmatpush1.msra.mxu0 0.0
        %914 = vmatprep.subr.mxu0 0.0
        %915 = vmatpush1.msra.mxu0 0.0
        %916 = vmatprep.subr.mxu0 0.0
        %917 = vmatpush1.msra.mxu0 0.0
        %918 = vmatprep.subr.mxu0 0.0
        %919 = vmatpush1.msra.mxu0 0.0
        %920 = vmatprep.subr.mxu0 0.0
        %921 = vmatpush1.msra.mxu0 0.0
        %922 = vmatprep.subr.mxu0 0.0
        %923 = vmatpush1.msra.mxu0 0.0
        %924 = vmatprep.subr.mxu0 0.0
        %925 = vmatpush1.msra.mxu0 0.0
        %926 = vmatprep.subr.mxu0 0.0
        %927 = vmatpush1.msra.mxu0 0.0
        %928 = vmatprep.subr.mxu0 0.0
        %929 = vmatpush1.msra.mxu0 0.0
        %930 = vmatprep.subr.mxu0 0.0
        %931 = vmatpush1.msra.mxu0 0.0
        %932 = vmatprep.subr.mxu0 0.0
        %933 = vmatpush1.msra.mxu0 0.0
        %934 = vmatprep.subr.mxu0 0.0
        %935 = vmatpush1.msra.mxu0 0.0
        %936 = vmatprep.subr.mxu0 0.0
        %937 = vmatpush1.msra.mxu0 0.0
        %938 = vmatprep.subr.mxu0 0.0
        %939 = vmatpush1.msra.mxu0 0.0
        %940 = vmatprep.subr.mxu0 0.0
        %941 = vmatpush1.msra.mxu0 0.0
        %942 = vmatprep.subr.mxu0 0.0
        %943 = vmatpush1.msra.mxu0 0.0
        %944 = vmatprep.subr.mxu0 0.0
        %945 = vmatpush1.msra.mxu0 0.0
        %946 = vmatprep.subr.mxu0 0.0
        %947 = vmatpush1.msra.mxu0 0.0
        %948 = vmatprep.subr.mxu0 0.0
        %949 = vmatpush1.msra.mxu0 0.0
        %950 = vmatprep.subr.mxu0 0.0
        %951 = vmatpush1.msra.mxu0 0.0
        %952 = vmatprep.subr.mxu0 0.0
        %953 = vmatpush1.msra.mxu0 0.0
        %954 = vmatprep.subr.mxu0 0.0
        %955 = vmatpush1.msra.mxu0 0.0
        %956 = vmatprep.subr.mxu0 0.0
        %957 = vmatpush1.msra.mxu0 0.0
        %958 = vmatprep.subr.mxu0 0.0
        %959 = vmatpush1.msra.mxu0 0.0
        %960 = vmatprep.subr.mxu0 0.0
        %961 = vmatpush1.msra.mxu0 0.0
        %962 = vmatprep.subr.mxu0 0.0
        %963 = vmatpush1.msra.mxu0 0.0
        %964 = vmatprep.subr.mxu0 0.0
        %965 = vmatpush1.msra.mxu0 0.0
        %966 = vmatprep.subr.mxu0 0.0
        %967 = vmatpush1.msra.mxu0 0.0
        %968 = vmatprep.subr.mxu0 0.0
        %969 = vmatpush1.msra.mxu0 0.0
        %970 = vmatprep.subr.mxu0 0.0
        %971 = vmatpush1.msra.mxu0 0.0
        %972 = vmatprep.subr.mxu0 0.0
        %973 = vmatpush1.msra.mxu0 0.0
        %974 = vmatprep.mubr.f32.mxu0 0.0
        %975 = vmatmul.mubr.f32.gmra.mrb[0].mxu0 %v908
        %v976 = vpop.f32.mrb[0].mxu0
        %v977 = vadd.f32 %v905, %v976
        %v978 = vpop.f32.mrb[0].mxu0
        %v979 = vadd.f32 %v905, %v978
        %980 = vdwg.mxu0
        %s981 = scalar_lea.vmem %s567, 4
        %v982 = vld [vmem:[%s981] sm:$0xf]
        %s983 = scalar_lea.vmem %s571, 4
        %v984 = vld [vmem:[%s983] sm:$0xf]
        %986 = vset.pattern.permute.xlu0 0
        %987 = vperm.xlu0 %986, %v984
        %v988 = vpop.permute.xlu0 %987
        %v991 = vsel %vm702, %v982, 0
        %993 = vmatprep.subr.mxu0 %v694
        %994 = vmatpush1.msra.mxu0 %v693
        %995 = vmatprep.subr.mxu0 0.0
        %996 = vmatpush1.msra.mxu0 0.0
        %997 = vmatprep.subr.mxu0 0.0
        %998 = vmatpush1.msra.mxu0 0.0
        %999 = vmatprep.subr.mxu0 0.0
        %1000 = vmatpush1.msra.mxu0 0.0
        %1001 = vmatprep.subr.mxu0 0.0
        %1002 = vmatpush1.msra.mxu0 0.0
        %1003 = vmatprep.subr.mxu0 0.0
        %1004 = vmatpush1.msra.mxu0 0.0
        %1005 = vmatprep.subr.mxu0 0.0
        %1006 = vmatpush1.msra.mxu0 0.0
        %1007 = vmatprep.subr.mxu0 0.0
        %1008 = vmatpush1.msra.mxu0 0.0
        %1009 = vmatprep.subr.mxu0 0.0
        %1010 = vmatpush1.msra.mxu0 0.0
        %1011 = vmatprep.subr.mxu0 0.0
        %1012 = vmatpush1.msra.mxu0 0.0
        %1013 = vmatprep.subr.mxu0 0.0
        %1014 = vmatpush1.msra.mxu0 0.0
        %1015 = vmatprep.subr.mxu0 0.0
        %1016 = vmatpush1.msra.mxu0 0.0
        %1017 = vmatprep.subr.mxu0 0.0
        %1018 = vmatpush1.msra.mxu0 0.0
        %1019 = vmatprep.subr.mxu0 0.0
        %1020 = vmatpush1.msra.mxu0 0.0
        %1021 = vmatprep.subr.mxu0 0.0
        %1022 = vmatpush1.msra.mxu0 0.0
        %1023 = vmatprep.subr.mxu0 0.0
        %1024 = vmatpush1.msra.mxu0 0.0
        %1025 = vmatprep.subr.mxu0 0.0
        %1026 = vmatpush1.msra.mxu0 0.0
        %1027 = vmatprep.subr.mxu0 0.0
        %1028 = vmatpush1.msra.mxu0 0.0
        %1029 = vmatprep.subr.mxu0 0.0
        %1030 = vmatpush1.msra.mxu0 0.0
        %1031 = vmatprep.subr.mxu0 0.0
        %1032 = vmatpush1.msra.mxu0 0.0
        %1033 = vmatprep.subr.mxu0 0.0
        %1034 = vmatpush1.msra.mxu0 0.0
        %1035 = vmatprep.subr.mxu0 0.0
        %1036 = vmatpush1.msra.mxu0 0.0
        %1037 = vmatprep.subr.mxu0 0.0
        %1038 = vmatpush1.msra.mxu0 0.0
        %1039 = vmatprep.subr.mxu0 0.0
        %1040 = vmatpush1.msra.mxu0 0.0
        %1041 = vmatprep.subr.mxu0 0.0
        %1042 = vmatpush1.msra.mxu0 0.0
        %1043 = vmatprep.subr.mxu0 0.0
        %1044 = vmatpush1.msra.mxu0 0.0
        %1045 = vmatprep.subr.mxu0 0.0
        %1046 = vmatpush1.msra.mxu0 0.0
        %1047 = vmatprep.subr.mxu0 0.0
        %1048 = vmatpush1.msra.mxu0 0.0
        %1049 = vmatprep.subr.mxu0 0.0
        %1050 = vmatpush1.msra.mxu0 0.0
        %1051 = vmatprep.subr.mxu0 0.0
        %1052 = vmatpush1.msra.mxu0 0.0
        %1053 = vmatprep.subr.mxu0 0.0
        %1054 = vmatpush1.msra.mxu0 0.0
        %1055 = vmatprep.subr.mxu0 0.0
        %1056 = vmatpush1.msra.mxu0 0.0
        %1057 = vmatprep.mubr.f32.mxu0 0.0
        %1058 = vmatmul.mubr.f32.gmra.mrb[0].mxu0 %v991
        %v1059 = vpop.f32.mrb[0].mxu0
        %v1060 = vadd.f32 %v988, %v1059
        %v1061 = vpop.f32.mrb[0].mxu0
        %v1062 = vadd.f32 %v988, %v1061
        %1063 = vdwg.mxu0
        %s1064 = scalar_lea.vmem %s580, 1
        %v1065 = vld [vmem:[%s1064] ss:$4 sm:$0x3]
        %v1067 = vlaneseq
        %v1068 = vshrl.u32 %v1067, 7
        %v1069 = vsub.s32 0, %v1068
        %v1070 = vrot.slane %v1065, %v1069
        %v1071 = vlaneseq
        %v1072 = vshrl.u32 %v1071, 7
        %v1073 = vsub.s32 1, %v1072
        %v1074 = vrot.slane %v1065, %v1073
        %s1077 = scalar_lea.vmem %s590, 1
        %v1078 = vld [vmem:[%s1077] ss:$4 sm:$0x3]
        %v1080 = vlaneseq
        %v1081 = vshrl.u32 %v1080, 7
        %v1082 = vsub.s32 0, %v1081
        %v1083 = vrot.slane %v1078, %v1082
        %v1084 = vlaneseq
        %v1085 = vshrl.u32 %v1084, 7
        %v1086 = vsub.s32 1, %v1085
        %v1087 = vrot.slane %v1078, %v1086
        %v1090 = vmul.f32 %v1070, %v977
        %v1091 = vmul.f32 %v1074, %v979
        %v1092 = vadd.f32 %v888, %v1090
        %v1093 = vadd.f32 %v889, %v1091
        %v1094 = vmul.f32 %v1083, %v1060
        %v1095 = vmul.f32 %v1087, %v1062
        %v1096 = vsub.f32 %v1092, %v1094
        %v1097 = vsub.f32 %v1093, %v1095
        %v1098 = vmul.f32 %v1070, %v1060
        %v1099 = vmul.f32 %v1074, %v1062
        %v1100 = vadd.f32 %v896, %v1098
        %v1101 = vadd.f32 %v897, %v1099
        %v1102 = vmul.f32 %v1083, %v977
        %v1103 = vmul.f32 %v1087, %v979
        %v1104 = vadd.f32 %v1100, %v1102
        %v1105 = vadd.f32 %v1101, %v1103
        %s1106 = scalar_lea.vmem %s559, 8
        %v1107 = vld [vmem:[%s1106] sm:$0xf]
        %s1108 = scalar_lea.vmem %s563, 8
        %v1109 = vld [vmem:[%s1108] sm:$0xf]
        %1111 = vset.pattern.permute.xlu0 0
        %1112 = vperm.xlu0 %1111, %v1109
        %v1113 = vpop.permute.xlu0 %1112
        %v1116 = vsel %vm702, %v1107, 0
        %1118 = vmatprep.subr.mxu0 %v656
        %1119 = vmatpush1.msra.mxu0 %v655
        %1120 = vmatprep.subr.mxu0 0.0
        %1121 = vmatpush1.msra.mxu0 0.0
        %1122 = vmatprep.subr.mxu0 0.0
        %1123 = vmatpush1.msra.mxu0 0.0
        %1124 = vmatprep.subr.mxu0 0.0
        %1125 = vmatpush1.msra.mxu0 0.0
        %1126 = vmatprep.subr.mxu0 0.0
        %1127 = vmatpush1.msra.mxu0 0.0
        %1128 = vmatprep.subr.mxu0 0.0
        %1129 = vmatpush1.msra.mxu0 0.0
        %1130 = vmatprep.subr.mxu0 0.0
        %1131 = vmatpush1.msra.mxu0 0.0
        %1132 = vmatprep.subr.mxu0 0.0
        %1133 = vmatpush1.msra.mxu0 0.0
        %1134 = vmatprep.subr.mxu0 0.0
        %1135 = vmatpush1.msra.mxu0 0.0
        %1136 = vmatprep.subr.mxu0 0.0
        %1137 = vmatpush1.msra.mxu0 0.0
        %1138 = vmatprep.subr.mxu0 0.0
        %1139 = vmatpush1.msra.mxu0 0.0
        %1140 = vmatprep.subr.mxu0 0.0
        %1141 = vmatpush1.msra.mxu0 0.0
        %1142 = vmatprep.subr.mxu0 0.0
        %1143 = vmatpush1.msra.mxu0 0.0
        %1144 = vmatprep.subr.mxu0 0.0
        %1145 = vmatpush1.msra.mxu0 0.0
        %1146 = vmatprep.subr.mxu0 0.0
        %1147 = vmatpush1.msra.mxu0 0.0
        %1148 = vmatprep.subr.mxu0 0.0
        %1149 = vmatpush1.msra.mxu0 0.0
        %1150 = vmatprep.subr.mxu0 0.0
        %1151 = vmatpush1.msra.mxu0 0.0
        %1152 = vmatprep.subr.mxu0 0.0
        %1153 = vmatpush1.msra.mxu0 0.0
        %1154 = vmatprep.subr.mxu0 0.0
        %1155 = vmatpush1.msra.mxu0 0.0
        %1156 = vmatprep.subr.mxu0 0.0
        %1157 = vmatpush1.msra.mxu0 0.0
        %1158 = vmatprep.subr.mxu0 0.0
        %1159 = vmatpush1.msra.mxu0 0.0
        %1160 = vmatprep.subr.mxu0 0.0
        %1161 = vmatpush1.msra.mxu0 0.0
        %1162 = vmatprep.subr.mxu0 0.0
        %1163 = vmatpush1.msra.mxu0 0.0
        %1164 = vmatprep.subr.mxu0 0.0
        %1165 = vmatpush1.msra.mxu0 0.0
        %1166 = vmatprep.subr.mxu0 0.0
        %1167 = vmatpush1.msra.mxu0 0.0
        %1168 = vmatprep.subr.mxu0 0.0
        %1169 = vmatpush1.msra.mxu0 0.0
        %1170 = vmatprep.subr.mxu0 0.0
        %1171 = vmatpush1.msra.mxu0 0.0
        %1172 = vmatprep.subr.mxu0 0.0
        %1173 = vmatpush1.msra.mxu0 0.0
        %1174 = vmatprep.subr.mxu0 0.0
        %1175 = vmatpush1.msra.mxu0 0.0
        %1176 = vmatprep.subr.mxu0 0.0
        %1177 = vmatpush1.msra.mxu0 0.0
        %1178 = vmatprep.subr.mxu0 0.0
        %1179 = vmatpush1.msra.mxu0 0.0
        %1180 = vmatprep.subr.mxu0 0.0
        %1181 = vmatpush1.msra.mxu0 0.0
        %1182 = vmatprep.mubr.f32.mxu0 0.0
        %1183 = vmatmul.mubr.f32.gmra.mrb[0].mxu0 %v1116
        %v1184 = vpop.f32.mrb[0].mxu0
        %v1185 = vadd.f32 %v1113, %v1184
        %v1186 = vpop.f32.mrb[0].mxu0
        %v1187 = vadd.f32 %v1113, %v1186
        %1188 = vdwg.mxu0
        %s1189 = scalar_lea.vmem %s567, 8
        %v1190 = vld [vmem:[%s1189] sm:$0xf]
        %s1191 = scalar_lea.vmem %s571, 8
        %v1192 = vld [vmem:[%s1191] sm:$0xf]
        %1194 = vset.pattern.permute.xlu0 0
        %1195 = vperm.xlu0 %1194, %v1192
        %v1196 = vpop.permute.xlu0 %1195
        %v1199 = vsel %vm702, %v1190, 0
        %1201 = vmatprep.subr.mxu0 %v694
        %1202 = vmatpush1.msra.mxu0 %v693
        %1203 = vmatprep.subr.mxu0 0.0
        %1204 = vmatpush1.msra.mxu0 0.0
        %1205 = vmatprep.subr.mxu0 0.0
        %1206 = vmatpush1.msra.mxu0 0.0
        %1207 = vmatprep.subr.mxu0 0.0
        %1208 = vmatpush1.msra.mxu0 0.0
        %1209 = vmatprep.subr.mxu0 0.0
        %1210 = vmatpush1.msra.mxu0 0.0
        %1211 = vmatprep.subr.mxu0 0.0
        %1212 = vmatpush1.msra.mxu0 0.0
        %1213 = vmatprep.subr.mxu0 0.0
        %1214 = vmatpush1.msra.mxu0 0.0
        %1215 = vmatprep.subr.mxu0 0.0
        %1216 = vmatpush1.msra.mxu0 0.0
        %1217 = vmatprep.subr.mxu0 0.0
        %1218 = vmatpush1.msra.mxu0 0.0
        %1219 = vmatprep.subr.mxu0 0.0
        %1220 = vmatpush1.msra.mxu0 0.0
        %1221 = vmatprep.subr.mxu0 0.0
        %1222 = vmatpush1.msra.mxu0 0.0
        %1223 = vmatprep.subr.mxu0 0.0
        %1224 = vmatpush1.msra.mxu0 0.0
        %1225 = vmatprep.subr.mxu0 0.0
        %1226 = vmatpush1.msra.mxu0 0.0
        %1227 = vmatprep.subr.mxu0 0.0
        %1228 = vmatpush1.msra.mxu0 0.0
        %1229 = vmatprep.subr.mxu0 0.0
        %1230 = vmatpush1.msra.mxu0 0.0
        %1231 = vmatprep.subr.mxu0 0.0
        %1232 = vmatpush1.msra.mxu0 0.0
        %1233 = vmatprep.subr.mxu0 0.0
        %1234 = vmatpush1.msra.mxu0 0.0
        %1235 = vmatprep.subr.mxu0 0.0
        %1236 = vmatpush1.msra.mxu0 0.0
        %1237 = vmatprep.subr.mxu0 0.0
        %1238 = vmatpush1.msra.mxu0 0.0
        %1239 = vmatprep.subr.mxu0 0.0
        %1240 = vmatpush1.msra.mxu0 0.0
        %1241 = vmatprep.subr.mxu0 0.0
        %1242 = vmatpush1.msra.mxu0 0.0
        %1243 = vmatprep.subr.mxu0 0.0
        %1244 = vmatpush1.msra.mxu0 0.0
        %1245 = vmatprep.subr.mxu0 0.0
        %1246 = vmatpush1.msra.mxu0 0.0
        %1247 = vmatprep.subr.mxu0 0.0
        %1248 = vmatpush1.msra.mxu0 0.0
        %1249 = vmatprep.subr.mxu0 0.0
        %1250 = vmatpush1.msra.mxu0 0.0
        %1251 = vmatprep.subr.mxu0 0.0
        %1252 = vmatpush1.msra.mxu0 0.0
        %1253 = vmatprep.subr.mxu0 0.0
        %1254 = vmatpush1.msra.mxu0 0.0
        %1255 = vmatprep.subr.mxu0 0.0
        %1256 = vmatpush1.msra.mxu0 0.0
        %1257 = vmatprep.subr.mxu0 0.0
        %1258 = vmatpush1.msra.mxu0 0.0
        %1259 = vmatprep.subr.mxu0 0.0
        %1260 = vmatpush1.msra.mxu0 0.0
        %1261 = vmatprep.subr.mxu0 0.0
        %1262 = vmatpush1.msra.mxu0 0.0
        %1263 = vmatprep.subr.mxu0 0.0
        %1264 = vmatpush1.msra.mxu0 0.0
        %1265 = vmatprep.mubr.f32.mxu0 0.0
        %1266 = vmatmul.mubr.f32.gmra.mrb[0].mxu0 %v1199
        %v1267 = vpop.f32.mrb[0].mxu0
        %v1268 = vadd.f32 %v1196, %v1267
        %v1269 = vpop.f32.mrb[0].mxu0
        %v1270 = vadd.f32 %v1196, %v1269
        %1271 = vdwg.mxu0
        %s1272 = scalar_lea.vmem %s580, 2
        %v1273 = vld [vmem:[%s1272] ss:$4 sm:$0x3]
        %v1275 = vlaneseq
        %v1276 = vshrl.u32 %v1275, 7
        %v1277 = vsub.s32 0, %v1276
        %v1278 = vrot.slane %v1273, %v1277
        %v1279 = vlaneseq
        %v1280 = vshrl.u32 %v1279, 7
        %v1281 = vsub.s32 1, %v1280
        %v1282 = vrot.slane %v1273, %v1281
        %s1285 = scalar_lea.vmem %s590, 2
        %v1286 = vld [vmem:[%s1285] ss:$4 sm:$0x3]
        %v1288 = vlaneseq
        %v1289 = vshrl.u32 %v1288, 7
        %v1290 = vsub.s32 0, %v1289
        %v1291 = vrot.slane %v1286, %v1290
        %v1292 = vlaneseq
        %v1293 = vshrl.u32 %v1292, 7
        %v1294 = vsub.s32 1, %v1293
        %v1295 = vrot.slane %v1286, %v1294
        %v1298 = vmul.f32 %v1278, %v1185
        %v1299 = vmul.f32 %v1282, %v1187
        %v1300 = vadd.f32 %v1096, %v1298
        %v1301 = vadd.f32 %v1097, %v1299
        %v1302 = vmul.f32 %v1291, %v1268
        %v1303 = vmul.f32 %v1295, %v1270
        %v1304 = vsub.f32 %v1300, %v1302
        %v1305 = vsub.f32 %v1301, %v1303
        %v1306 = vmul.f32 %v1278, %v1268
        %v1307 = vmul.f32 %v1282, %v1270
        %v1308 = vadd.f32 %v1104, %v1306
        %v1309 = vadd.f32 %v1105, %v1307
        %v1310 = vmul.f32 %v1291, %v1185
        %v1311 = vmul.f32 %v1295, %v1187
        %v1312 = vadd.f32 %v1308, %v1310
        %v1313 = vadd.f32 %v1309, %v1311
        %s1314 = scalar_lea.vmem %s559, 12
        %v1315 = vld [vmem:[%s1314] sm:$0xf]
        %s1316 = scalar_lea.vmem %s563, 12
        %v1317 = vld [vmem:[%s1316] sm:$0xf]
        %1319 = vset.pattern.permute.xlu0 0
        %1320 = vperm.xlu0 %1319, %v1317
        %v1321 = vpop.permute.xlu0 %1320
        %v1324 = vsel %vm702, %v1315, 0
        %1326 = vmatprep.subr.mxu0 %v656
        %1327 = vmatpush1.msra.mxu0 %v655
        %1328 = vmatprep.subr.mxu0 0.0
        %1329 = vmatpush1.msra.mxu0 0.0
        %1330 = vmatprep.subr.mxu0 0.0
        %1331 = vmatpush1.msra.mxu0 0.0
        %1332 = vmatprep.subr.mxu0 0.0
        %1333 = vmatpush1.msra.mxu0 0.0
        %1334 = vmatprep.subr.mxu0 0.0
        %1335 = vmatpush1.msra.mxu0 0.0
        %1336 = vmatprep.subr.mxu0 0.0
        %1337 = vmatpush1.msra.mxu0 0.0
        %1338 = vmatprep.subr.mxu0 0.0
        %1339 = vmatpush1.msra.mxu0 0.0
        %1340 = vmatprep.subr.mxu0 0.0
        %1341 = vmatpush1.msra.mxu0 0.0
        %1342 = vmatprep.subr.mxu0 0.0
        %1343 = vmatpush1.msra.mxu0 0.0
        %1344 = vmatprep.subr.mxu0 0.0
        %1345 = vmatpush1.msra.mxu0 0.0
        %1346 = vmatprep.subr.mxu0 0.0
        %1347 = vmatpush1.msra.mxu0 0.0
        %1348 = vmatprep.subr.mxu0 0.0
        %1349 = vmatpush1.msra.mxu0 0.0
        %1350 = vmatprep.subr.mxu0 0.0
        %1351 = vmatpush1.msra.mxu0 0.0
        %1352 = vmatprep.subr.mxu0 0.0
        %1353 = vmatpush1.msra.mxu0 0.0
        %1354 = vmatprep.subr.mxu0 0.0
        %1355 = vmatpush1.msra.mxu0 0.0
        %1356 = vmatprep.subr.mxu0 0.0
        %1357 = vmatpush1.msra.mxu0 0.0
        %1358 = vmatprep.subr.mxu0 0.0
        %1359 = vmatpush1.msra.mxu0 0.0
        %1360 = vmatprep.subr.mxu0 0.0
        %1361 = vmatpush1.msra.mxu0 0.0
        %1362 = vmatprep.subr.mxu0 0.0
        %1363 = vmatpush1.msra.mxu0 0.0
        %1364 = vmatprep.subr.mxu0 0.0
        %1365 = vmatpush1.msra.mxu0 0.0
        %1366 = vmatprep.subr.mxu0 0.0
        %1367 = vmatpush1.msra.mxu0 0.0
        %1368 = vmatprep.subr.mxu0 0.0
        %1369 = vmatpush1.msra.mxu0 0.0
        %1370 = vmatprep.subr.mxu0 0.0
        %1371 = vmatpush1.msra.mxu0 0.0
        %1372 = vmatprep.subr.mxu0 0.0
        %1373 = vmatpush1.msra.mxu0 0.0
        %1374 = vmatprep.subr.mxu0 0.0
        %1375 = vmatpush1.msra.mxu0 0.0
        %1376 = vmatprep.subr.mxu0 0.0
        %1377 = vmatpush1.msra.mxu0 0.0
        %1378 = vmatprep.subr.mxu0 0.0
        %1379 = vmatpush1.msra.mxu0 0.0
        %1380 = vmatprep.subr.mxu0 0.0
        %1381 = vmatpush1.msra.mxu0 0.0
        %1382 = vmatprep.subr.mxu0 0.0
        %1383 = vmatpush1.msra.mxu0 0.0
        %1384 = vmatprep.subr.mxu0 0.0
        %1385 = vmatpush1.msra.mxu0 0.0
        %1386 = vmatprep.subr.mxu0 0.0
        %1387 = vmatpush1.msra.mxu0 0.0
        %1388 = vmatprep.subr.mxu0 0.0
        %1389 = vmatpush1.msra.mxu0 0.0
        %1390 = vmatprep.mubr.f32.mxu0 0.0
        %1391 = vmatmul.mubr.f32.gmra.mrb[0].mxu0 %v1324
        %v1392 = vpop.f32.mrb[0].mxu0
        %v1393 = vadd.f32 %v1321, %v1392
        %v1394 = vpop.f32.mrb[0].mxu0
        %v1395 = vadd.f32 %v1321, %v1394
        %1396 = vdwg.mxu0
        %s1397 = scalar_lea.vmem %s567, 12
        %v1398 = vld [vmem:[%s1397] sm:$0xf]
        %s1399 = scalar_lea.vmem %s571, 12
        %v1400 = vld [vmem:[%s1399] sm:$0xf]
        %1402 = vset.pattern.permute.xlu0 0
        %1403 = vperm.xlu0 %1402, %v1400
        %v1404 = vpop.permute.xlu0 %1403
        %v1407 = vsel %vm702, %v1398, 0
        %1409 = vmatprep.subr.mxu0 %v694
        %1410 = vmatpush1.msra.mxu0 %v693
        %1411 = vmatprep.subr.mxu0 0.0
        %1412 = vmatpush1.msra.mxu0 0.0
        %1413 = vmatprep.subr.mxu0 0.0
        %1414 = vmatpush1.msra.mxu0 0.0
        %1415 = vmatprep.subr.mxu0 0.0
        %1416 = vmatpush1.msra.mxu0 0.0
        %1417 = vmatprep.subr.mxu0 0.0
        %1418 = vmatpush1.msra.mxu0 0.0
        %1419 = vmatprep.subr.mxu0 0.0
        %1420 = vmatpush1.msra.mxu0 0.0
        %1421 = vmatprep.subr.mxu0 0.0
        %1422 = vmatpush1.msra.mxu0 0.0
        %1423 = vmatprep.subr.mxu0 0.0
        %1424 = vmatpush1.msra.mxu0 0.0
        %1425 = vmatprep.subr.mxu0 0.0
        %1426 = vmatpush1.msra.mxu0 0.0
        %1427 = vmatprep.subr.mxu0 0.0
        %1428 = vmatpush1.msra.mxu0 0.0
        %1429 = vmatprep.subr.mxu0 0.0
        %1430 = vmatpush1.msra.mxu0 0.0
        %1431 = vmatprep.subr.mxu0 0.0
        %1432 = vmatpush1.msra.mxu0 0.0
        %1433 = vmatprep.subr.mxu0 0.0
        %1434 = vmatpush1.msra.mxu0 0.0
        %1435 = vmatprep.subr.mxu0 0.0
        %1436 = vmatpush1.msra.mxu0 0.0
        %1437 = vmatprep.subr.mxu0 0.0
        %1438 = vmatpush1.msra.mxu0 0.0
        %1439 = vmatprep.subr.mxu0 0.0
        %1440 = vmatpush1.msra.mxu0 0.0
        %1441 = vmatprep.subr.mxu0 0.0
        %1442 = vmatpush1.msra.mxu0 0.0
        %1443 = vmatprep.subr.mxu0 0.0
        %1444 = vmatpush1.msra.mxu0 0.0
        %1445 = vmatprep.subr.mxu0 0.0
        %1446 = vmatpush1.msra.mxu0 0.0
        %1447 = vmatprep.subr.mxu0 0.0
        %1448 = vmatpush1.msra.mxu0 0.0
        %1449 = vmatprep.subr.mxu0 0.0
        %1450 = vmatpush1.msra.mxu0 0.0
        %1451 = vmatprep.subr.mxu0 0.0
        %1452 = vmatpush1.msra.mxu0 0.0
        %1453 = vmatprep.subr.mxu0 0.0
        %1454 = vmatpush1.msra.mxu0 0.0
        %1455 = vmatprep.subr.mxu0 0.0
        %1456 = vmatpush1.msra.mxu0 0.0
        %1457 = vmatprep.subr.mxu0 0.0
        %1458 = vmatpush1.msra.mxu0 0.0
        %1459 = vmatprep.subr.mxu0 0.0
        %1460 = vmatpush1.msra.mxu0 0.0
        %1461 = vmatprep.subr.mxu0 0.0
        %1462 = vmatpush1.msra.mxu0 0.0
        %1463 = vmatprep.subr.mxu0 0.0
        %1464 = vmatpush1.msra.mxu0 0.0
        %1465 = vmatprep.subr.mxu0 0.0
        %1466 = vmatpush1.msra.mxu0 0.0
        %1467 = vmatprep.subr.mxu0 0.0
        %1468 = vmatpush1.msra.mxu0 0.0
        %1469 = vmatprep.subr.mxu0 0.0
        %1470 = vmatpush1.msra.mxu0 0.0
        %1471 = vmatprep.subr.mxu0 0.0
        %1472 = vmatpush1.msra.mxu0 0.0
        %1473 = vmatprep.mubr.f32.mxu0 0.0
        %1474 = vmatmul.mubr.f32.gmra.mrb[0].mxu0 %v1407
        %v1475 = vpop.f32.mrb[0].mxu0
        %v1476 = vadd.f32 %v1404, %v1475
        %v1477 = vpop.f32.mrb[0].mxu0
        %v1478 = vadd.f32 %v1404, %v1477
        %1479 = vdwg.mxu0
        %s1480 = scalar_lea.vmem %s580, 3
        %v1481 = vld [vmem:[%s1480] ss:$4 sm:$0x3]
        %v1483 = vlaneseq
        %v1484 = vshrl.u32 %v1483, 7
        %v1485 = vsub.s32 0, %v1484
        %v1486 = vrot.slane %v1481, %v1485
        %v1487 = vlaneseq
        %v1488 = vshrl.u32 %v1487, 7
        %v1489 = vsub.s32 1, %v1488
        %v1490 = vrot.slane %v1481, %v1489
        %s1493 = scalar_lea.vmem %s590, 3
        %v1494 = vld [vmem:[%s1493] ss:$4 sm:$0x3]
        %v1496 = vlaneseq
        %v1497 = vshrl.u32 %v1496, 7
        %v1498 = vsub.s32 0, %v1497
        %v1499 = vrot.slane %v1494, %v1498
        %v1500 = vlaneseq
        %v1501 = vshrl.u32 %v1500, 7
        %v1502 = vsub.s32 1, %v1501
        %v1503 = vrot.slane %v1494, %v1502
        %v1506 = vmul.f32 %v1486, %v1393
        %v1507 = vmul.f32 %v1490, %v1395
        %v1508 = vadd.f32 %v1304, %v1506
        %v1509 = vadd.f32 %v1305, %v1507
        %v1510 = vmul.f32 %v1499, %v1476
        %v1511 = vmul.f32 %v1503, %v1478
        %v1512 = vsub.f32 %v1508, %v1510
        %v1513 = vsub.f32 %v1509, %v1511
        %v1514 = vmul.f32 %v1486, %v1476
        %v1515 = vmul.f32 %v1490, %v1478
        %v1516 = vadd.f32 %v1312, %v1514
        %v1517 = vadd.f32 %v1313, %v1515
        %v1518 = vmul.f32 %v1499, %v1393
        %v1519 = vmul.f32 %v1503, %v1395
        %v1520 = vadd.f32 %v1516, %v1518
        %v1521 = vadd.f32 %v1517, %v1519
        %v1524 = vcombine.low %v1512, %v1513
        %1526 = vst [vmem:[%s542] sm:$0xff] %v1524
        %v1529 = vcombine.low %v1520, %v1521
        %1531 = vst [vmem:[%s549] sm:$0xff] %v1529
        %s1532 = sand.u32 %s331, 1
        %s1533 = scalar_lea.sflag [#allocation3], %s1532
        %s1534 = sand.u32 %s331, 1
        %s1535 = smul.addr %s1534, 8
        %s1536 = scalar_lea.vmem [#allocation2], %s1535
        %s1537 = sand.u32 %s361, 1
        %s1538 = scalar_lea.sflag [#allocation5], %s1537
        %s1539 = sand.u32 %s361, 1
        %s1540 = smul.addr %s1539, 8
        %s1541 = scalar_lea.vmem [#allocation4], %s1540
        // Predicated region
        $region65: #{tpu_custom_call.1} parent=63 // pred_check
          %p1542 = pneg %p341
        $region66: #{tpu_custom_call.1} parent=63 // pred_check_branch
          %1544 = sbr.rel (%p1542) target = $region68
        $region67: #{tpu_custom_call.1} parent=63 // pred_region
          %s1545 = smul.u32 2, %s36
          %s1547 = ssub.s32 128, 128
          %1548 = vsyncadd %s1533, %s1547
          %s1549 = smul.addr %s37, 2
          %s1550 = sadd.s32 %s1545, %s1549
          %s1551 = smul.addr %s35, 2
          %s1552 = sadd.s32 %s1550, %s1551
          %s1553 = smul.addr %s1552, 64
          %s1554 = scalar_lea.hbm %s11, %s1553
          %s1556 = sshll.u32 %s1536, 4
          %s1557 = int_to_ptr.vmem [resolvable:$true] %s1556
          %1559 = dma.vmem_to_hbm [thread:$0]  %s1557, 128, %s1554, %s1533
        $region68: #{tpu_custom_call.1} parent=63 // pred_fallthru
          _
        // Predicated region
        $region69: #{tpu_custom_call.1} parent=63 // pred_check
          %p1560 = pneg %p371
        $region70: #{tpu_custom_call.1} parent=63 // pred_check_branch
          %1562 = sbr.rel (%p1560) target = $region72
        $region71: #{tpu_custom_call.1} parent=63 // pred_region
          %s1563 = smul.u32 2, %s36
          %s1565 = ssub.s32 128, 128
          %1566 = vsyncadd %s1538, %s1565
          %s1567 = smul.addr %s37, 2
          %s1568 = sadd.s32 %s1563, %s1567
          %s1569 = smul.addr %s35, 2
          %s1570 = sadd.s32 %s1568, %s1569
          %s1571 = smul.addr %s1570, 64
          %s1572 = scalar_lea.hbm %s12, %s1571
          %s1574 = sshll.u32 %s1541, 4
          %s1575 = int_to_ptr.vmem [resolvable:$true] %s1574
          %1577 = dma.vmem_to_hbm [thread:$0]  %s1575, 128, %s1572, %s1538
        $region72: #{tpu_custom_call.1} parent=63 // pred_fallthru
          _
      $region64: #{tpu_custom_call.1} parent=5 // pred_fallthru
        _
      %p1578 = scmp.le.s32.totalorder 2, %s25
      // Predicated region
      $region73: #{tpu_custom_call.1} parent=5 // pred_check
        %p1579 = pneg %p1578
      $region74: #{tpu_custom_call.1} parent=5 // pred_check_branch
        %1581 = sbr.rel (%p1579) target = $region76
      $region75: #{tpu_custom_call.1} parent=5 // pred_region
        %s1582 = ssub.s32 %s25, 2
        // Predicated region
        $region77: #{tpu_custom_call.1} parent=75 // pred_check
          %p1583 = pneg %p347
        $region78: #{tpu_custom_call.1} parent=75 // pred_check_branch
          %1585 = sbr.rel (%p1583) target = $region80
        $region79: #{tpu_custom_call.1} parent=75 // pred_region
          %s1586 = sand.u32 %s332, 1
          %s1587 = scalar_lea.sflag [#allocation3], %s1586
          %s1588 = sand.u32 %s332, 1
          %s1589 = smul.addr %s1588, 8
          %s1590 = scalar_lea.vmem [#allocation2], %s1589
          %1591 = dma.done %s1587, 128
        $region80: #{tpu_custom_call.1} parent=75 // pred_fallthru
          _
        // Predicated region
        $region81: #{tpu_custom_call.1} parent=75 // pred_check
          %p1592 = pneg %p377
        $region82: #{tpu_custom_call.1} parent=75 // pred_check_branch
          %1594 = sbr.rel (%p1592) target = $region84
        $region83: #{tpu_custom_call.1} parent=75 // pred_region
          %s1595 = sand.u32 %s362, 1
          %s1596 = scalar_lea.sflag [#allocation5], %s1595
          %s1597 = sand.u32 %s362, 1
          %s1598 = smul.addr %s1597, 8
          %s1599 = scalar_lea.vmem [#allocation4], %s1598
          %1600 = dma.done %s1596, 128
        $region84: #{tpu_custom_call.1} parent=75 // pred_fallthru
          _
      $region76: #{tpu_custom_call.1} parent=5 // pred_fallthru
        _
    $region6: #{tpu_custom_call.1} parent=1 // loop_footer
      %s29 = sadd.s32 1, %s25
    $region7: #{tpu_custom_call.1} parent=1 // loop_footer_branch
      %24 = sbr.rel target = $region3
    $region8: #{tpu_custom_call.1} parent=1 // loop_exit
      _
    %1601 = vsyncpa [#allocation3], 1
    %s1602 = scalar_lea.sflag [#allocation3], 1
    %1603 = vsyncpa %s1602, 1
    %1604 = vsyncpa [#allocation5], 1
    %s1605 = scalar_lea.sflag [#allocation5], 1
    %1606 = vsyncpa %s1605, 1

</llo_original>
